<compile_context>
chip_gen: v7x
topology: tpu7x:2x2x1
jax: 0.10.0
libtpu: 0.0.40
codegen_flags: <defaults>
</compile_context>

<pallas_src>
import functools

import jax
import jax.numpy as jnp
from jax import lax
from jax.experimental import pallas as pl
from jax.experimental.pallas import tpu as pltpu

INPUT_CH = 64
N_CHANNELS = 32
KERNEL_SIZE = 8
POOL_SIZE = 8
N_CLASSES = 10
MAX_LEN = 971
BN_EPS = 1e-5
BATCH_TILE = 8


def _m4_kernel(x_ref, w_ref, b_ref, fcw_ref, fcb_ref, o_ref, *,
               n_pool, l_pad, tb):
    c_out = b_ref.shape[0]
    seg = tb * l_pad                       # total lane width of this block

    # ---- Conv1d: all 8 taps AND all tb batch segments in ONE MXU matmul ----
    # w_ref: (K*C_out, C_in) bf16 (BN1/BN2 folded in); x_ref: (C_in, tb*l_pad).
    y = jnp.dot(w_ref[...], x_ref[...],
                preferred_element_type=jnp.float32)        # (K*C_out, tb*l_pad)

    # Tap k occupies rows [k*C_out, (k+1)*C_out); shift its output left by k.
    # Rolls are circular over the full lane axis, but the wrapped tail only
    # lands in the last 7 (padded, never-read) lanes of each segment.
    acc = y[0:c_out, :]
    for k in range(1, KERNEL_SIZE):
        acc = acc + pltpu.roll(y[k * c_out:(k + 1) * c_out, :],
                               seg - k, axis=1)
    act = jnp.tanh(acc + b_ref[...])                        # (C_out, tb*l_pad)

    # ---- MaxPool1d(8): roll-max tree; m[:, i] = max(act[:, i:i+8]) ----
    m = act
    for s in (1, 2, 4):
        m = jnp.maximum(m, pltpu.roll(m, seg - s, axis=1))

    # ---- Global avg pool: masked lane-sum per 128-aligned batch segment ----
    idx = lax.broadcasted_iota(jnp.int32, (c_out, l_pad), 1)
    window_mask = (idx % POOL_SIZE == 0) & (idx < n_pool * POOL_SIZE)
    cols = []
    for b in range(tb):                                     # lane-aligned slices
        seg_b = m[:, b * l_pad:(b + 1) * l_pad]
        cols.append(jnp.sum(jnp.where(window_mask, seg_b, 0.0),
                            axis=1, keepdims=True))         # (C_out, 1)
    pooled = jnp.concatenate(cols, axis=1)                  # (C_out, tb)

    # ---- fc1 (1/n_pool folded into fcw) + log_softmax over classes ----
    logits = lax.dot_general(
        pooled, fcw_ref[...],
        dimension_numbers=(((0,), (0,)), ((), ())),
        preferred_element_type=jnp.float32) + fcb_ref[...]  # (tb, 10)
    mx = jnp.max(logits, axis=-1, keepdims=True)
    z = logits - mx
    lse = jnp.log(jnp.sum(jnp.exp(z), axis=-1, keepdims=True))
    o_ref[...] = z - lse


def m4compact_forward(x, params, *, tb=BATCH_TILE):
    x = x.astype(jnp.float32)
    B, C_in, T = x.shape
    L = min(T, MAX_LEN)                  # x[:, :, 0:971]
    x = x[:, :, :L]
    l_out = L - KERNEL_SIZE + 1
    n_pool = l_out // POOL_SIZE
    if n_pool < 1:
        raise ValueError("time dimension too short: need at least 15 samples")

    # ---- Fold BN1 / BN2 (inference mode) into the conv weight & bias ----
    s1 = params["bn1_gamma"] / jnp.sqrt(params["bn1_var"] + BN_EPS)
    t1 = params["bn1_beta"] - params["bn1_mean"] * s1
    s2 = params["bn2_gamma"] / jnp.sqrt(params["bn2_var"] + BN_EPS)
    t2 = params["bn2_beta"] - params["bn2_mean"] * s2
    w = params["conv1_w"].astype(jnp.float32)               # (C_out, C_in, K)
    w_folded = w * s1[None, :, None] * s2[:, None, None]
    bias = (s2 * (params["conv1_b"] + jnp.einsum("oik,i->o", w, t1)) + t2)
    bias = bias[:, None].astype(jnp.float32)                # (C_out, 1)
    # (K*C_out, C_in): row k*C_out + o holds tap k / out-channel o.
    w_all = jnp.transpose(w_folded, (2, 0, 1)).reshape(
        KERNEL_SIZE * N_CHANNELS, C_in).astype(jnp.bfloat16)
    # 1/n_pool (global avg pool) folded into the fc weight.
    fcw = (params["fc1_w"].T / n_pool).astype(jnp.float32)  # (C_out, 10)
    fcb = params["fc1_b"][None, :].astype(jnp.float32)      # (1, 10)

    # ---- Lane-dense activation slab: (C_in, B_pad * l_pad), bf16 ----
    l_pad = ((L + 127) // 128) * 128
    b_pad = ((B + tb - 1) // tb) * tb
    x = jnp.pad(x, ((0, b_pad - B), (0, 0), (0, l_pad - L)))
    x = jnp.transpose(x, (1, 0, 2)).reshape(
        C_in, b_pad * l_pad).astype(jnp.bfloat16)

    kernel = functools.partial(_m4_kernel, n_pool=n_pool, l_pad=l_pad, tb=tb)
    out = pl.pallas_call(
        kernel,
        out_shape=jax.ShapeDtypeStruct((b_pad, N_CLASSES), jnp.float32),
        grid=(b_pad // tb,),
        in_specs=[
            pl.BlockSpec((C_in, tb * l_pad), lambda i: (0, i)),
            pl.BlockSpec((KERNEL_SIZE * N_CHANNELS, C_in), lambda i: (0, 0)),
            pl.BlockSpec((N_CHANNELS, 1), lambda i: (0, 0)),
            pl.BlockSpec((N_CHANNELS, N_CLASSES), lambda i: (0, 0)),
            pl.BlockSpec((1, N_CLASSES), lambda i: (0, 0)),
        ],
        out_specs=pl.BlockSpec((tb, N_CLASSES), lambda i: (i, 0)),
        compiler_params=pltpu.CompilerParams(
            dimension_semantics=("parallel",),
            vmem_limit_bytes=32 * 1024 * 1024),
    )(x, w_all, bias, fcw, fcb)
    return out[:B, None, :]                                  # (B, 1, 10)


def m4compact_reference(x, params):
    """Pure-JAX reference mirroring the PyTorch forward (inference-mode BN)."""
    x = x[:, :, :MAX_LEN].astype(jnp.float32)

    def bn(v, g, b, m, var):
        return ((v - m[None, :, None]) / jnp.sqrt(var[None, :, None] + BN_EPS)
                * g[None, :, None] + b[None, :, None])

    x = bn(x, params["bn1_gamma"], params["bn1_beta"],
           params["bn1_mean"], params["bn1_var"])
    y = jax.lax.conv_general_dilated(
        x, params["conv1_w"], window_strides=(1,), padding="VALID",
        dimension_numbers=("NCH", "OIH", "NCH"),
        precision=jax.lax.Precision.HIGHEST)
    y = y + params["conv1_b"][None, :, None]
    y = bn(y, params["bn2_gamma"], params["bn2_beta"],
           params["bn2_mean"], params["bn2_var"])
    y = jnp.tanh(y)
    n_pool = y.shape[-1] // POOL_SIZE
    y = y[:, :, :n_pool * POOL_SIZE].reshape(y.shape[0], y.shape[1], n_pool,
                                             POOL_SIZE).max(-1)
    y = y.mean(-1, keepdims=True)                 # global avg pool -> (B, 32, 1)
    y = jnp.transpose(y, (0, 2, 1))               # (B, 1, 32)
    logits = jnp.einsum("boc,nc->bon", y, params["fc1_w"],
                        precision=jax.lax.Precision.HIGHEST) \
        + params["fc1_b"][None, None, :]
    return jax.nn.log_softmax(logits, axis=2)


def init_params(key):
    ks = jax.random.split(key, 8)
    conv_scale = 1.0 / (INPUT_CH * KERNEL_SIZE) ** 0.5
    fc_scale = 1.0 / N_CHANNELS ** 0.5
    return {
        "bn1_gamma": jax.random.uniform(ks[0], (INPUT_CH,), jnp.float32, 0.5, 1.5),
        "bn1_beta": 0.1 * jax.random.normal(ks[1], (INPUT_CH,), jnp.float32),
        "bn1_mean": jnp.zeros((INPUT_CH,), jnp.float32),
        "bn1_var": jnp.ones((INPUT_CH,), jnp.float32),
        "bn2_gamma": jax.random.uniform(ks[2], (N_CHANNELS,), jnp.float32, 0.5, 1.5),
        "bn2_beta": 0.1 * jax.random.normal(ks[3], (N_CHANNELS,), jnp.float32),
        "bn2_mean": jnp.zeros((N_CHANNELS,), jnp.float32),
        "bn2_var": jnp.ones((N_CHANNELS,), jnp.float32),
        "conv1_w": jax.random.uniform(ks[4], (N_CHANNELS, INPUT_CH, KERNEL_SIZE),
                                      jnp.float32, -conv_scale, conv_scale),
        "conv1_b": jax.random.uniform(ks[5], (N_CHANNELS,), jnp.float32,
                                      -conv_scale, conv_scale),
        "fc1_w": jax.random.uniform(ks[6], (N_CLASSES, N_CHANNELS), jnp.float32,
                                    -fc_scale, fc_scale),
        "fc1_b": jax.random.uniform(ks[7], (N_CLASSES,), jnp.float32,
                                    -fc_scale, fc_scale),
    }


if __name__ == "__main__":
    key = jax.random.PRNGKey(0)
    pkey, xkey = jax.random.split(key)
    params = init_params(pkey)

    B, T = 2, 128                      # small time dim (< 971) for the example
    x = jax.random.normal(xkey, (B, INPUT_CH, T), jnp.float32)

    out = m4compact_forward(x, params)
    jax.block_until_ready(out)
    assert out.shape == (B, 1, N_CLASSES), out.shape

    ref = m4compact_reference(x, params)
    err = float(jnp.max(jnp.abs(out - ref)))
    assert err < 1e-2, f"max abs err vs reference: {err}"

    print("KERNEL_OK")
</pallas_src>

<mosaic_0001>
module attributes {stable_mosaic.version = 11 : i64} {
  func.func @_m4_kernel(%arg0: i32, %arg1: memref<64x1024xbf16, #tpu.memory_space<vmem>>, %arg2: memref<256x64xbf16, #tpu.memory_space<vmem>>, %arg3: memref<32x1xf32, #tpu.memory_space<vmem>>, %arg4: memref<32x10xf32, #tpu.memory_space<vmem>>, %arg5: memref<1x10xf32, #tpu.memory_space<vmem>>, %arg6: memref<8x10xf32, #tpu.memory_space<vmem>>) attributes {dimension_semantics = [#tpu.dimension_semantics<parallel>], iteration_bounds = array<i64: 1>, scalar_prefetch = 0 : i64, scratch_operands = 0 : i64, tpu.core_type = #tpu.core_type<tc>, window_params = [{transform_indices = @transform_0, window_bounds = array<i64: 64, 1024>}, {pipeline_mode = #tpu.pipeline_mode<synchronous>, transform_indices = @transform_1, window_bounds = array<i64: 256, 64>}, {pipeline_mode = #tpu.pipeline_mode<synchronous>, transform_indices = @transform_2, window_bounds = array<i64: 32, 1>}, {pipeline_mode = #tpu.pipeline_mode<synchronous>, transform_indices = @transform_3, window_bounds = array<i64: 32, 10>}, {pipeline_mode = #tpu.pipeline_mode<synchronous>, transform_indices = @transform_4, window_bounds = array<i64: 1, 10>}, {transform_indices = @transform_5, window_bounds = array<i64: 8, 10>}]} {
    %c0 = arith.constant 0 : index
    %c0_0 = arith.constant 0 : index
    %0 = vector.load %arg2[%c0, %c0_0] : memref<256x64xbf16, #tpu.memory_space<vmem>>, vector<256x64xbf16>
    %c0_1 = arith.constant 0 : index
    %c0_2 = arith.constant 0 : index
    %1 = vector.load %arg1[%c0_1, %c0_2] : memref<64x1024xbf16, #tpu.memory_space<vmem>>, vector<64x1024xbf16>
    %cst = arith.constant dense<0.000000e+00> : vector<256x1024xf32>
    %2 = tpu.matmul %0, %1, %cst {dimension_numbers = #tpu.dot_dimension_numbers<[1], [0], [0], [1], [0, 0, 1, 1], [], []>} : vector<256x64xbf16>, vector<64x1024xbf16>, vector<256x1024xf32> -> vector<256x1024xf32>
    %3 = vector.extract_strided_slice %2 {offsets = [0, 0], sizes = [32, 1024], strides = [1, 1]} : vector<256x1024xf32> to vector<32x1024xf32>
    %4 = vector.extract_strided_slice %2 {offsets = [32, 0], sizes = [32, 1024], strides = [1, 1]} : vector<256x1024xf32> to vector<32x1024xf32>
    %c1023_i32 = arith.constant 1023 : i32
    %5 = tpu.dynamic_rotate %4 by %c1023_i32 dim 1 : vector<32x1024xf32>, i32 -> vector<32x1024xf32>
    %6 = arith.addf %3, %5 : vector<32x1024xf32>
    %7 = vector.extract_strided_slice %2 {offsets = [64, 0], sizes = [32, 1024], strides = [1, 1]} : vector<256x1024xf32> to vector<32x1024xf32>
    %c1022_i32 = arith.constant 1022 : i32
    %8 = tpu.dynamic_rotate %7 by %c1022_i32 dim 1 : vector<32x1024xf32>, i32 -> vector<32x1024xf32>
    %9 = arith.addf %6, %8 : vector<32x1024xf32>
    %10 = vector.extract_strided_slice %2 {offsets = [96, 0], sizes = [32, 1024], strides = [1, 1]} : vector<256x1024xf32> to vector<32x1024xf32>
    %c1021_i32 = arith.constant 1021 : i32
    %11 = tpu.dynamic_rotate %10 by %c1021_i32 dim 1 : vector<32x1024xf32>, i32 -> vector<32x1024xf32>
    %12 = arith.addf %9, %11 : vector<32x1024xf32>
    %13 = vector.extract_strided_slice %2 {offsets = [128, 0], sizes = [32, 1024], strides = [1, 1]} : vector<256x1024xf32> to vector<32x1024xf32>
    %c1020_i32 = arith.constant 1020 : i32
    %14 = tpu.dynamic_rotate %13 by %c1020_i32 dim 1 : vector<32x1024xf32>, i32 -> vector<32x1024xf32>
    %15 = arith.addf %12, %14 : vector<32x1024xf32>
    %16 = vector.extract_strided_slice %2 {offsets = [160, 0], sizes = [32, 1024], strides = [1, 1]} : vector<256x1024xf32> to vector<32x1024xf32>
    %c1019_i32 = arith.constant 1019 : i32
    %17 = tpu.dynamic_rotate %16 by %c1019_i32 dim 1 : vector<32x1024xf32>, i32 -> vector<32x1024xf32>
    %18 = arith.addf %15, %17 : vector<32x1024xf32>
    %19 = vector.extract_strided_slice %2 {offsets = [192, 0], sizes = [32, 1024], strides = [1, 1]} : vector<256x1024xf32> to vector<32x1024xf32>
    %c1018_i32 = arith.constant 1018 : i32
    %20 = tpu.dynamic_rotate %19 by %c1018_i32 dim 1 : vector<32x1024xf32>, i32 -> vector<32x1024xf32>
    %21 = arith.addf %18, %20 : vector<32x1024xf32>
    %22 = vector.extract_strided_slice %2 {offsets = [224, 0], sizes = [32, 1024], strides = [1, 1]} : vector<256x1024xf32> to vector<32x1024xf32>
    %c1017_i32 = arith.constant 1017 : i32
    %23 = tpu.dynamic_rotate %22 by %c1017_i32 dim 1 : vector<32x1024xf32>, i32 -> vector<32x1024xf32>
    %24 = arith.addf %21, %23 : vector<32x1024xf32>
    %c0_3 = arith.constant 0 : index
    %c0_4 = arith.constant 0 : index
    %25 = vector.load %arg3[%c0_3, %c0_4] : memref<32x1xf32, #tpu.memory_space<vmem>>, vector<32x1xf32>
    %26 = vector.broadcast %25 : vector<32x1xf32> to vector<32x1024xf32>
    %27 = arith.addf %24, %26 : vector<32x1024xf32>
    %28 = math.tanh %27 : vector<32x1024xf32>
    %c1023_i32_5 = arith.constant 1023 : i32
    %29 = tpu.dynamic_rotate %28 by %c1023_i32_5 dim 1 : vector<32x1024xf32>, i32 -> vector<32x1024xf32>
    %30 = arith.maximumf %28, %29 : vector<32x1024xf32>
    %c1022_i32_6 = arith.constant 1022 : i32
    %31 = tpu.dynamic_rotate %30 by %c1022_i32_6 dim 1 : vector<32x1024xf32>, i32 -> vector<32x1024xf32>
    %32 = arith.maximumf %30, %31 : vector<32x1024xf32>
    %c1020_i32_7 = arith.constant 1020 : i32
    %33 = tpu.dynamic_rotate %32 by %c1020_i32_7 dim 1 : vector<32x1024xf32>, i32 -> vector<32x1024xf32>
    %34 = arith.maximumf %32, %33 : vector<32x1024xf32>
    %35 = tpu.iota {dimensions = array<i32: 1>} : vector<32x128xi32>
    %c8_i32 = arith.constant 8 : i32
    %c0_i32 = arith.constant 0 : i32
    %36 = arith.cmpi eq, %c8_i32, %c0_i32 : i32
    %c1_i32 = arith.constant 1 : i32
    %37 = arith.select %36, %c1_i32, %c8_i32 : i32
    %38 = vector.broadcast %37 : i32 to vector<32x128xi32>
    %39 = arith.remsi %35, %38 : vector<32x128xi32>
    %c0_i32_8 = arith.constant 0 : i32
    %40 = vector.broadcast %c0_i32_8 : i32 to vector<32x128xi32>
    %41 = arith.cmpi ne, %39, %40 : vector<32x128xi32>
    %c0_i32_9 = arith.constant 0 : i32
    %42 = vector.broadcast %c0_i32_9 : i32 to vector<32x128xi32>
    %43 = arith.cmpi slt, %39, %42 : vector<32x128xi32>
    %c0_i32_10 = arith.constant 0 : i32
    %44 = arith.cmpi slt, %37, %c0_i32_10 : i32
    %45 = vector.broadcast %44 : i1 to vector<32x128xi1>
    %46 = vector.broadcast %45 : vector<32x128xi1> to vector<32x128xi1>
    %47 = arith.xori %43, %46 : vector<32x128xi1>
    %48 = arith.andi %47, %41 : vector<32x128xi1>
    %49 = vector.broadcast %37 : i32 to vector<32x128xi32>
    %50 = arith.addi %39, %49 : vector<32x128xi32>
    %51 = arith.select %48, %50, %39 : vector<32x128xi1>, vector<32x128xi32>
    %c0_i32_11 = arith.constant 0 : i32
    %52 = vector.broadcast %c0_i32_11 : i32 to vector<32x128xi32>
    %53 = arith.cmpi eq, %51, %52 : vector<32x128xi32>
    %c120_i32 = arith.constant 120 : i32
    %54 = vector.broadcast %c120_i32 : i32 to vector<32x128xi32>
    %55 = arith.cmpi slt, %35, %54 : vector<32x128xi32>
    %56 = arith.andi %53, %55 : vector<32x128xi1>
    %57 = vector.extract_strided_slice %34 {offsets = [0, 0], sizes = [32, 128], strides = [1, 1]} : vector<32x1024xf32> to vector<32x128xf32>
    %cst_12 = arith.constant 0.000000e+00 : f32
    %58 = vector.broadcast %cst_12 : f32 to vector<32x128xf32>
    %59 = arith.select %56, %57, %58 : vector<32x128xi1>, vector<32x128xf32>
    %cst_13 = arith.constant dense<0.000000e+00> : vector<32xf32>
    %60 = vector.multi_reduction <add>, %59, %cst_13 [1] : vector<32x128xf32> to vector<32xf32>
    %61 = vector.shape_cast %60 : vector<32xf32> to vector<32x1xf32>
    %62 = vector.extract_strided_slice %34 {offsets = [0, 128], sizes = [32, 128], strides = [1, 1]} : vector<32x1024xf32> to vector<32x128xf32>
    %cst_14 = arith.constant 0.000000e+00 : f32
    %63 = vector.broadcast %cst_14 : f32 to vector<32x128xf32>
    %64 = arith.select %56, %62, %63 : vector<32x128xi1>, vector<32x128xf32>
    %cst_15 = arith.constant dense<0.000000e+00> : vector<32xf32>
    %65 = vector.multi_reduction <add>, %64, %cst_15 [1] : vector<32x128xf32> to vector<32xf32>
    %66 = vector.shape_cast %65 : vector<32xf32> to vector<32x1xf32>
    %67 = vector.extract_strided_slice %34 {offsets = [0, 256], sizes = [32, 128], strides = [1, 1]} : vector<32x1024xf32> to vector<32x128xf32>
    %cst_16 = arith.constant 0.000000e+00 : f32
    %68 = vector.broadcast %cst_16 : f32 to vector<32x128xf32>
    %69 = arith.select %56, %67, %68 : vector<32x128xi1>, vector<32x128xf32>
    %cst_17 = arith.constant dense<0.000000e+00> : vector<32xf32>
    %70 = vector.multi_reduction <add>, %69, %cst_17 [1] : vector<32x128xf32> to vector<32xf32>
    %71 = vector.shape_cast %70 : vector<32xf32> to vector<32x1xf32>
    %72 = vector.extract_strided_slice %34 {offsets = [0, 384], sizes = [32, 128], strides = [1, 1]} : vector<32x1024xf32> to vector<32x128xf32>
    %cst_18 = arith.constant 0.000000e+00 : f32
    %73 = vector.broadcast %cst_18 : f32 to vector<32x128xf32>
    %74 = arith.select %56, %72, %73 : vector<32x128xi1>, vector<32x128xf32>
    %cst_19 = arith.constant dense<0.000000e+00> : vector<32xf32>
    %75 = vector.multi_reduction <add>, %74, %cst_19 [1] : vector<32x128xf32> to vector<32xf32>
    %76 = vector.shape_cast %75 : vector<32xf32> to vector<32x1xf32>
    %77 = vector.extract_strided_slice %34 {offsets = [0, 512], sizes = [32, 128], strides = [1, 1]} : vector<32x1024xf32> to vector<32x128xf32>
    %cst_20 = arith.constant 0.000000e+00 : f32
    %78 = vector.broadcast %cst_20 : f32 to vector<32x128xf32>
    %79 = arith.select %56, %77, %78 : vector<32x128xi1>, vector<32x128xf32>
    %cst_21 = arith.constant dense<0.000000e+00> : vector<32xf32>
    %80 = vector.multi_reduction <add>, %79, %cst_21 [1] : vector<32x128xf32> to vector<32xf32>
    %81 = vector.shape_cast %80 : vector<32xf32> to vector<32x1xf32>
    %82 = vector.extract_strided_slice %34 {offsets = [0, 640], sizes = [32, 128], strides = [1, 1]} : vector<32x1024xf32> to vector<32x128xf32>
    %cst_22 = arith.constant 0.000000e+00 : f32
    %83 = vector.broadcast %cst_22 : f32 to vector<32x128xf32>
    %84 = arith.select %56, %82, %83 : vector<32x128xi1>, vector<32x128xf32>
    %cst_23 = arith.constant dense<0.000000e+00> : vector<32xf32>
    %85 = vector.multi_reduction <add>, %84, %cst_23 [1] : vector<32x128xf32> to vector<32xf32>
    %86 = vector.shape_cast %85 : vector<32xf32> to vector<32x1xf32>
    %87 = vector.extract_strided_slice %34 {offsets = [0, 768], sizes = [32, 128], strides = [1, 1]} : vector<32x1024xf32> to vector<32x128xf32>
    %cst_24 = arith.constant 0.000000e+00 : f32
    %88 = vector.broadcast %cst_24 : f32 to vector<32x128xf32>
    %89 = arith.select %56, %87, %88 : vector<32x128xi1>, vector<32x128xf32>
    %cst_25 = arith.constant dense<0.000000e+00> : vector<32xf32>
    %90 = vector.multi_reduction <add>, %89, %cst_25 [1] : vector<32x128xf32> to vector<32xf32>
    %91 = vector.shape_cast %90 : vector<32xf32> to vector<32x1xf32>
    %92 = vector.extract_strided_slice %34 {offsets = [0, 896], sizes = [32, 128], strides = [1, 1]} : vector<32x1024xf32> to vector<32x128xf32>
    %cst_26 = arith.constant 0.000000e+00 : f32
    %93 = vector.broadcast %cst_26 : f32 to vector<32x128xf32>
    %94 = arith.select %56, %92, %93 : vector<32x128xi1>, vector<32x128xf32>
    %cst_27 = arith.constant dense<0.000000e+00> : vector<32xf32>
    %95 = vector.multi_reduction <add>, %94, %cst_27 [1] : vector<32x128xf32> to vector<32xf32>
    %96 = vector.shape_cast %95 : vector<32xf32> to vector<32x1xf32>
    %97 = tpu.concatenate %61, %66, %71, %76, %81, %86, %91, %96 in 1 : vector<32x1xf32>, vector<32x1xf32>, vector<32x1xf32>, vector<32x1xf32>, vector<32x1xf32>, vector<32x1xf32>, vector<32x1xf32>, vector<32x1xf32> -> vector<32x8xf32>
    %c0_28 = arith.constant 0 : index
    %c0_29 = arith.constant 0 : index
    %98 = vector.load %arg4[%c0_28, %c0_29] : memref<32x10xf32, #tpu.memory_space<vmem>>, vector<32x10xf32>
    %cst_30 = arith.constant dense<0.000000e+00> : vector<8x10xf32>
    %99 = tpu.matmul %97, %98, %cst_30 {dimension_numbers = #tpu.dot_dimension_numbers<[0], [0], [1], [1], [0, 1, 1, 1], [], []>} : vector<32x8xf32>, vector<32x10xf32>, vector<8x10xf32> -> vector<8x10xf32>
    %c0_31 = arith.constant 0 : index
    %c0_32 = arith.constant 0 : index
    %100 = vector.load %arg5[%c0_31, %c0_32] : memref<1x10xf32, #tpu.memory_space<vmem>>, vector<1x10xf32>
    %101 = vector.broadcast %100 : vector<1x10xf32> to vector<8x10xf32>
    %102 = arith.addf %99, %101 : vector<8x10xf32>
    %cst_33 = arith.constant dense<0xFF800000> : vector<8xf32>
    %103 = vector.multi_reduction <maximumf>, %102, %cst_33 [1] : vector<8x10xf32> to vector<8xf32>
    %104 = vector.shape_cast %103 : vector<8xf32> to vector<8x1xf32>
    %105 = vector.broadcast %104 : vector<8x1xf32> to vector<8x10xf32>
    %106 = arith.subf %102, %105 : vector<8x10xf32>
    %107 = math.exp %106 : vector<8x10xf32>
    %cst_34 = arith.constant dense<0.000000e+00> : vector<8xf32>
    %108 = vector.multi_reduction <add>, %107, %cst_34 [1] : vector<8x10xf32> to vector<8xf32>
    %109 = vector.shape_cast %108 : vector<8xf32> to vector<8x1xf32>
    %110 = math.log %109 : vector<8x1xf32>
    %111 = vector.broadcast %110 : vector<8x1xf32> to vector<8x10xf32>
    %112 = arith.subf %106, %111 : vector<8x10xf32>
    %c0_35 = arith.constant 0 : index
    %c0_36 = arith.constant 0 : index
    %113 = vector.load %arg6[%c0_35, %c0_36] : memref<8x10xf32, #tpu.memory_space<vmem>>, vector<8x10xf32>
    tpu.vector_store %arg6[%c0_35, %c0_36], %112 {strides = array<i32>} : memref<8x10xf32, #tpu.memory_space<vmem>>, vector<8x10xf32>,
    return
  }
  func.func @transform_0(%arg0: i32) -> (i32, i32) {
    %c0_i32 = arith.constant 0 : i32
    %c0_i32_0 = arith.constant 0 : i32
    return %c0_i32, %arg0 : i32, i32
  }
  func.func @transform_1(%arg0: i32) -> (i32, i32) {
    %c0_i32 = arith.constant 0 : i32
    %c0_i32_0 = arith.constant 0 : i32
    %c0_i32_1 = arith.constant 0 : i32
    return %c0_i32, %c0_i32_0 : i32, i32
  }
  func.func @transform_2(%arg0: i32) -> (i32, i32) {
    %c0_i32 = arith.constant 0 : i32
    %c0_i32_0 = arith.constant 0 : i32
    %c0_i32_1 = arith.constant 0 : i32
    return %c0_i32, %c0_i32_0 : i32, i32
  }
  func.func @transform_3(%arg0: i32) -> (i32, i32) {
    %c0_i32 = arith.constant 0 : i32
    %c0_i32_0 = arith.constant 0 : i32
    %c0_i32_1 = arith.constant 0 : i32
    return %c0_i32, %c0_i32_0 : i32, i32
  }
  func.func @transform_4(%arg0: i32) -> (i32, i32) {
    %c0_i32 = arith.constant 0 : i32
    %c0_i32_0 = arith.constant 0 : i32
    %c0_i32_1 = arith.constant 0 : i32
    return %c0_i32, %c0_i32_0 : i32, i32
  }
  func.func @transform_5(%arg0: i32) -> (i32, i32) {
    %c0_i32 = arith.constant 0 : i32
    %c0_i32_0 = arith.constant 0 : i32
    return %arg0, %c0_i32 : i32, i32
  }
}

</mosaic_0001>

<llo_original>
// kernel: tpu_custom_call.1
$region0: #{tpu_custom_call.1}
  #allocation0 [shape = 'u32[]', space=smem, size = 0x4, offset = 0x4, fixed_abs, tag = 'smem constant byte address 0x4 - core index']
  #allocation1 [shape = 'u32[144,128]{1,0:T(1,128)}', space=vmem, size = 0x12000, scoped, tag = 'internal scratch']
  %s0 = inlined_call_operand.vmem [shape: bf16[64,1024], index: 0, kind: input, shape index: {}]
  %s1 = inlined_call_operand.vmem [shape: bf16[256,64], index: 1, kind: input, shape index: {}]
  %s2 = inlined_call_operand.vmem [shape: f32[32,1], index: 2, kind: input, shape index: {}]
  %s3 = inlined_call_operand.vmem [shape: f32[32,10], index: 3, kind: input, shape index: {}]
  %s4 = inlined_call_operand.vmem [shape: f32[1,10], index: 4, kind: input, shape index: {}]
  %s5 = inlined_call_operand.hbm [shape: f32[8,10], index: 5, kind: output, shape index: {}]
  %s6 = sld [smem:[#allocation0]]
  $region30: #{tpu_custom_call.1} parent=0
    _
  %s8 = ssub.s32 1, %s6
  %s9 = scalar_select 0, %s8, %s6
  $region1: #{tpu_custom_call.1} parent=0
    #allocation2 [shape = 'u8[4096]{0}', space=vmem, size = 0x1000, scoped, tag = 'output window, operand 0, single buffered']
    #allocation3 [shape = 's32[1]{0}', space=sflag, size = 0x4, scoped, tag = 'scoped memory for tpu_custom_call.1']
    %10 = vsyncpa [#allocation3], 0
    // Predicated region
    $region2: #{tpu_custom_call.1} parent=1 // pred_check
      _
    $region3: #{tpu_custom_call.1} parent=1 // pred_check_branch
      %12 = sbr.rel (0) target = $region5
    $region4: #{tpu_custom_call.1} parent=1 // pred_region
      _
    $region5: #{tpu_custom_call.1} parent=1 // pred_fallthru
      _
    // Predicated region
    $region6: #{tpu_custom_call.1} parent=1 // pred_check
      _
    $region7: #{tpu_custom_call.1} parent=1 // pred_check_branch
      %14 = sbr.rel (0) target = $region9
    $region8: #{tpu_custom_call.1} parent=1 // pred_region
      _
    $region9: #{tpu_custom_call.1} parent=1 // pred_fallthru
      _
    // Predicated region
    $region10: #{tpu_custom_call.1} parent=1 // pred_check
      _
    $region11: #{tpu_custom_call.1} parent=1 // pred_check_branch
      %16 = sbr.rel (0) target = $region13
    $region12: #{tpu_custom_call.1} parent=1 // pred_region
      _
    $region13: #{tpu_custom_call.1} parent=1 // pred_fallthru
      _
    // Predicated region
    $region14: #{tpu_custom_call.1} parent=1 // pred_check
      _
    $region15: #{tpu_custom_call.1} parent=1 // pred_check_branch
      %18 = sbr.rel (0) target = $region17
    $region16: #{tpu_custom_call.1} parent=1 // pred_region
      _
    $region17: #{tpu_custom_call.1} parent=1 // pred_fallthru
      _
    // Predicated region
    $region18: #{tpu_custom_call.1} parent=1 // pred_check
      _
    $region19: #{tpu_custom_call.1} parent=1 // pred_check_branch
      %20 = sbr.rel (0) target = $region21
    $region20: #{tpu_custom_call.1} parent=1 // pred_region
      _
    $region21: #{tpu_custom_call.1} parent=1 // pred_fallthru
      _
    %v22 = vld [vmem:[%s1] sm:$0xf]
    %v23 = vld [vmem:[%s1 + $0x4] sm:$0xf]
    %v24 = vld [vmem:[%s1 + $0x8] sm:$0xf]
    %v25 = vld [vmem:[%s1 + $0xc] sm:$0xf]
    %v26 = vld [vmem:[%s1 + $0x10] sm:$0xf]
    %v27 = vld [vmem:[%s1 + $0x14] sm:$0xf]
    %v28 = vld [vmem:[%s1 + $0x18] sm:$0xf]
    %v29 = vld [vmem:[%s1 + $0x1c] sm:$0xf]
    %v30 = vld [vmem:[%s1 + $0x20] sm:$0xf]
    %v31 = vld [vmem:[%s1 + $0x24] sm:$0xf]
    %v32 = vld [vmem:[%s1 + $0x28] sm:$0xf]
    %v33 = vld [vmem:[%s1 + $0x2c] sm:$0xf]
    %v34 = vld [vmem:[%s1 + $0x30] sm:$0xf]
    %v35 = vld [vmem:[%s1 + $0x34] sm:$0xf]
    %v36 = vld [vmem:[%s1 + $0x38] sm:$0xf]
    %v37 = vld [vmem:[%s1 + $0x3c] sm:$0xf]
    %v38 = vld [vmem:[%s1 + $0x40] sm:$0xf]
    %v39 = vld [vmem:[%s1 + $0x44] sm:$0xf]
    %v40 = vld [vmem:[%s1 + $0x48] sm:$0xf]
    %v41 = vld [vmem:[%s1 + $0x4c] sm:$0xf]
    %v42 = vld [vmem:[%s1 + $0x50] sm:$0xf]
    %v43 = vld [vmem:[%s1 + $0x54] sm:$0xf]
    %v44 = vld [vmem:[%s1 + $0x58] sm:$0xf]
    %v45 = vld [vmem:[%s1 + $0x5c] sm:$0xf]
    %v46 = vld [vmem:[%s1 + $0x60] sm:$0xf]
    %v47 = vld [vmem:[%s1 + $0x64] sm:$0xf]
    %v48 = vld [vmem:[%s1 + $0x68] sm:$0xf]
    %v49 = vld [vmem:[%s1 + $0x6c] sm:$0xf]
    %v50 = vld [vmem:[%s1 + $0x70] sm:$0xf]
    %v51 = vld [vmem:[%s1 + $0x74] sm:$0xf]
    %v52 = vld [vmem:[%s1 + $0x78] sm:$0xf]
    %v53 = vld [vmem:[%s1 + $0x7c] sm:$0xf]
    %v54 = vld [vmem:[%s0] sm:$0xff]
    %v55 = vld [vmem:[%s0 + $0x8] sm:$0xff]
    %v56 = vld [vmem:[%s0 + $0x10] sm:$0xff]
    %v57 = vld [vmem:[%s0 + $0x18] sm:$0xff]
    %v58 = vld [vmem:[%s0 + $0x20] sm:$0xff]
    %v59 = vld [vmem:[%s0 + $0x28] sm:$0xff]
    %v60 = vld [vmem:[%s0 + $0x30] sm:$0xff]
    %v61 = vld [vmem:[%s0 + $0x38] sm:$0xff]
    %v62 = vld [vmem:[%s0 + $0x40] sm:$0xff]
    %v63 = vld [vmem:[%s0 + $0x48] sm:$0xff]
    %v64 = vld [vmem:[%s0 + $0x50] sm:$0xff]
    %v65 = vld [vmem:[%s0 + $0x58] sm:$0xff]
    %v66 = vld [vmem:[%s0 + $0x60] sm:$0xff]
    %v67 = vld [vmem:[%s0 + $0x68] sm:$0xff]
    %v68 = vld [vmem:[%s0 + $0x70] sm:$0xff]
    %v69 = vld [vmem:[%s0 + $0x78] sm:$0xff]
    %v70 = vld [vmem:[%s0 + $0x80] sm:$0xff]
    %v71 = vld [vmem:[%s0 + $0x88] sm:$0xff]
    %v72 = vld [vmem:[%s0 + $0x90] sm:$0xff]
    %v73 = vld [vmem:[%s0 + $0x98] sm:$0xff]
    %v74 = vld [vmem:[%s0 + $0xa0] sm:$0xff]
    %v75 = vld [vmem:[%s0 + $0xa8] sm:$0xff]
    %v76 = vld [vmem:[%s0 + $0xb0] sm:$0xff]
    %v77 = vld [vmem:[%s0 + $0xb8] sm:$0xff]
    %v78 = vld [vmem:[%s0 + $0xc0] sm:$0xff]
    %v79 = vld [vmem:[%s0 + $0xc8] sm:$0xff]
    %v80 = vld [vmem:[%s0 + $0xd0] sm:$0xff]
    %v81 = vld [vmem:[%s0 + $0xd8] sm:$0xff]
    %v82 = vld [vmem:[%s0 + $0xe0] sm:$0xff]
    %v83 = vld [vmem:[%s0 + $0xe8] sm:$0xff]
    %v84 = vld [vmem:[%s0 + $0xf0] sm:$0xff]
    %v85 = vld [vmem:[%s0 + $0xf8] sm:$0xff]
    %v118 = vunpack.c.l.b16 %v22
    %v119 = vunpack.c.l.b16 %v23
    %v120 = vunpack.c.l.b16 %v24
    %v121 = vunpack.c.l.b16 %v25
    %v122 = vunpack.c.l.b16 %v26
    %v123 = vunpack.c.l.b16 %v27
    %v124 = vunpack.c.l.b16 %v28
    %v125 = vunpack.c.l.b16 %v29
    %v126 = vunpack.c.l.b16 %v30
    %v127 = vunpack.c.l.b16 %v31
    %v128 = vunpack.c.l.b16 %v32
    %v129 = vunpack.c.l.b16 %v33
    %v130 = vunpack.c.l.b16 %v34
    %v131 = vunpack.c.l.b16 %v35
    %v132 = vunpack.c.l.b16 %v36
    %v133 = vunpack.c.l.b16 %v37
    %v134 = vunpack.c.l.b16 %v38
    %v135 = vunpack.c.l.b16 %v39
    %v136 = vunpack.c.l.b16 %v40
    %v137 = vunpack.c.l.b16 %v41
    %v138 = vunpack.c.l.b16 %v42
    %v139 = vunpack.c.l.b16 %v43
    %v140 = vunpack.c.l.b16 %v44
    %v141 = vunpack.c.l.b16 %v45
    %v142 = vunpack.c.l.b16 %v46
    %v143 = vunpack.c.l.b16 %v47
    %v144 = vunpack.c.l.b16 %v48
    %v145 = vunpack.c.l.b16 %v49
    %v146 = vunpack.c.l.b16 %v50
    %v147 = vunpack.c.l.b16 %v51
    %v148 = vunpack.c.l.b16 %v52
    %v149 = vunpack.c.l.b16 %v53
    %v150 = vpack.c.b16 %v119, %v118
    %v151 = vpack.c.b16 %v121, %v120
    %v152 = vpack.c.b16 %v123, %v122
    %v153 = vpack.c.b16 %v125, %v124
    %v154 = vpack.c.b16 %v127, %v126
    %v155 = vpack.c.b16 %v129, %v128
    %v156 = vpack.c.b16 %v131, %v130
    %v157 = vpack.c.b16 %v133, %v132
    %v158 = vpack.c.b16 %v135, %v134
    %v159 = vpack.c.b16 %v137, %v136
    %v160 = vpack.c.b16 %v139, %v138
    %v161 = vpack.c.b16 %v141, %v140
    %v162 = vpack.c.b16 %v143, %v142
    %v163 = vpack.c.b16 %v145, %v144
    %v164 = vpack.c.b16 %v147, %v146
    %v165 = vpack.c.b16 %v149, %v148
    %v198 = vunpack.c.l.b16 %v54
    %v199 = vunpack.c.h.b16 %v54
    %v200 = vunpack.c.l.b16 %v55
    %v201 = vunpack.c.h.b16 %v55
    %v202 = vunpack.c.l.b16 %v56
    %v203 = vunpack.c.h.b16 %v56
    %v204 = vunpack.c.l.b16 %v57
    %v205 = vunpack.c.h.b16 %v57
    %v206 = vunpack.c.l.b16 %v58
    %v207 = vunpack.c.h.b16 %v58
    %v208 = vunpack.c.l.b16 %v59
    %v209 = vunpack.c.h.b16 %v59
    %v210 = vunpack.c.l.b16 %v60
    %v211 = vunpack.c.h.b16 %v60
    %v212 = vunpack.c.l.b16 %v61
    %v213 = vunpack.c.h.b16 %v61
    %v214 = vunpack.c.l.b16 %v62
    %v215 = vunpack.c.h.b16 %v62
    %v216 = vunpack.c.l.b16 %v63
    %v217 = vunpack.c.h.b16 %v63
    %v218 = vunpack.c.l.b16 %v64
    %v219 = vunpack.c.h.b16 %v64
    %v220 = vunpack.c.l.b16 %v65
    %v221 = vunpack.c.h.b16 %v65
    %v222 = vunpack.c.l.b16 %v66
    %v223 = vunpack.c.h.b16 %v66
    %v224 = vunpack.c.l.b16 %v67
    %v225 = vunpack.c.h.b16 %v67
    %v226 = vunpack.c.l.b16 %v68
    %v227 = vunpack.c.h.b16 %v68
    %v228 = vunpack.c.l.b16 %v69
    %v229 = vunpack.c.h.b16 %v69
    %v230 = vunpack.c.l.b16 %v70
    %v231 = vunpack.c.h.b16 %v70
    %v232 = vunpack.c.l.b16 %v71
    %v233 = vunpack.c.h.b16 %v71
    %v234 = vunpack.c.l.b16 %v72
    %v235 = vunpack.c.h.b16 %v72
    %v236 = vunpack.c.l.b16 %v73
    %v237 = vunpack.c.h.b16 %v73
    %v238 = vunpack.c.l.b16 %v74
    %v239 = vunpack.c.h.b16 %v74
    %v240 = vunpack.c.l.b16 %v75
    %v241 = vunpack.c.h.b16 %v75
    %v242 = vunpack.c.l.b16 %v76
    %v243 = vunpack.c.h.b16 %v76
    %v244 = vunpack.c.l.b16 %v77
    %v245 = vunpack.c.h.b16 %v77
    %v246 = vunpack.c.l.b16 %v78
    %v247 = vunpack.c.h.b16 %v78
    %v248 = vunpack.c.l.b16 %v79
    %v249 = vunpack.c.h.b16 %v79
    %v250 = vunpack.c.l.b16 %v80
    %v251 = vunpack.c.h.b16 %v80
    %v252 = vunpack.c.l.b16 %v81
    %v253 = vunpack.c.h.b16 %v81
    %v254 = vunpack.c.l.b16 %v82
    %v255 = vunpack.c.h.b16 %v82
    %v256 = vunpack.c.l.b16 %v83
    %v257 = vunpack.c.h.b16 %v83
    %v258 = vunpack.c.l.b16 %v84
    %v259 = vunpack.c.h.b16 %v84
    %v260 = vunpack.c.l.b16 %v85
    %v261 = vunpack.c.h.b16 %v85
    %v262 = vpack.c.b16 %v206, %v198
    %v263 = vpack.c.b16 %v207, %v199
    %v264 = vpack.c.b16 %v208, %v200
    %v265 = vpack.c.b16 %v209, %v201
    %v266 = vpack.c.b16 %v210, %v202
    %v267 = vpack.c.b16 %v211, %v203
    %v268 = vpack.c.b16 %v212, %v204
    %v269 = vpack.c.b16 %v213, %v205
    %v270 = vpack.c.b16 %v222, %v214
    %v271 = vpack.c.b16 %v223, %v215
    %v272 = vpack.c.b16 %v224, %v216
    %v273 = vpack.c.b16 %v225, %v217
    %v274 = vpack.c.b16 %v226, %v218
    %v275 = vpack.c.b16 %v227, %v219
    %v276 = vpack.c.b16 %v228, %v220
    %v277 = vpack.c.b16 %v229, %v221
    %v278 = vpack.c.b16 %v238, %v230
    %v279 = vpack.c.b16 %v239, %v231
    %v280 = vpack.c.b16 %v240, %v232
    %v281 = vpack.c.b16 %v241, %v233
    %v282 = vpack.c.b16 %v242, %v234
    %v283 = vpack.c.b16 %v243, %v235
    %v284 = vpack.c.b16 %v244, %v236
    %v285 = vpack.c.b16 %v245, %v237
    %v286 = vpack.c.b16 %v254, %v246
    %v287 = vpack.c.b16 %v255, %v247
    %v288 = vpack.c.b16 %v256, %v248
    %v289 = vpack.c.b16 %v257, %v249
    %v290 = vpack.c.b16 %v258, %v250
    %v291 = vpack.c.b16 %v259, %v251
    %v292 = vpack.c.b16 %v260, %v252
    %v293 = vpack.c.b16 %v261, %v253
    %vm326 = vcmask 523264
    %v328 = vsel %vm326, %v150, 0
    %v331 = vsel %vm326, %v151, 0
    %v334 = vsel %vm326, %v152, 0
    %v337 = vsel %vm326, %v153, 0
    %v340 = vsel %vm326, %v154, 0
    %v343 = vsel %vm326, %v155, 0
    %v346 = vsel %vm326, %v156, 0
    %v349 = vsel %vm326, %v157, 0
    %v352 = vsel %vm326, %v158, 0
    %v355 = vsel %vm326, %v159, 0
    %v358 = vsel %vm326, %v160, 0
    %v361 = vsel %vm326, %v161, 0
    %v364 = vsel %vm326, %v162, 0
    %v367 = vsel %vm326, %v163, 0
    %v370 = vsel %vm326, %v164, 0
    %v373 = vsel %vm326, %v165, 0
    %375 = vmatprep.subr.bf16.mxu0 %v263
    %376 = vmatpush1.bf16.msra.mxu0 %v262
    %377 = vmatprep.subr.bf16.mxu0 %v271
    %378 = vmatpush1.bf16.msra.mxu0 %v270
    %379 = vmatprep.subr.bf16.mxu0 %v279
    %380 = vmatpush1.bf16.msra.mxu0 %v278
    %381 = vmatprep.subr.bf16.mxu0 %v287
    %382 = vmatpush1.bf16.msra.mxu0 %v286
    %383 = vmatprep.subr.bf16.mxu0 0
    %384 = vmatpush1.bf16.msra.mxu0 0
    %385 = vmatprep.subr.bf16.mxu0 0
    %386 = vmatpush1.bf16.msra.mxu0 0
    %387 = vmatprep.subr.bf16.mxu0 0
    %388 = vmatpush1.bf16.msra.mxu0 0
    %389 = vmatprep.subr.bf16.mxu0 0
    %390 = vmatpush1.bf16.msra.mxu0 0
    %391 = vmatprep.subr.bf16.mxu0 0
    %392 = vmatpush1.bf16.msra.mxu0 0
    %393 = vmatprep.subr.bf16.mxu0 0
    %394 = vmatpush1.bf16.msra.mxu0 0
    %395 = vmatprep.subr.bf16.mxu0 0
    %396 = vmatpush1.bf16.msra.mxu0 0
    %397 = vmatprep.subr.bf16.mxu0 0
    %398 = vmatpush1.bf16.msra.mxu0 0
    %399 = vmatprep.subr.bf16.mxu0 0
    %400 = vmatpush1.bf16.msra.mxu0 0
    %401 = vmatprep.subr.bf16.mxu0 0
    %402 = vmatpush1.bf16.msra.mxu0 0
    %403 = vmatprep.subr.bf16.mxu0 0
    %404 = vmatpush1.bf16.msra.mxu0 0
    %405 = vmatprep.subr.bf16.mxu0 0
    %406 = vmatpush1.bf16.msra.mxu0 0
    %407 = vmatprep.mubr.bf16.mxu0 0
    %408 = vmatmul.mubr.bf16.gmra.mrb[0].mxu0 %v328
    %v409 = vpop.f32.mrb[0].mxu0
    %v410 = vadd.f32 0.0, %v409
    %v411 = vpop.f32.mrb[0].mxu0
    %v412 = vadd.f32 0.0, %v411
    %v413 = vpop.f32.mrb[0].mxu0
    %v414 = vadd.f32 0.0, %v413
    %v415 = vpop.f32.mrb[0].mxu0
    %v416 = vadd.f32 0.0, %v415
    %417 = vmatprep.mubr.bf16.mxu0 0
    %418 = vmatmul.mubr.bf16.gmra.mrb[0].mxu0 %v331
    %v419 = vpop.f32.mrb[0].mxu0
    %v420 = vadd.f32 0.0, %v419
    %v421 = vpop.f32.mrb[0].mxu0
    %v422 = vadd.f32 0.0, %v421
    %v423 = vpop.f32.mrb[0].mxu0
    %v424 = vadd.f32 0.0, %v423
    %v425 = vpop.f32.mrb[0].mxu0
    %v426 = vadd.f32 0.0, %v425
    %427 = vmatprep.mubr.bf16.mxu0 0
    %428 = vmatmul.mubr.bf16.gmra.mrb[0].mxu0 %v334
    %v429 = vpop.f32.mrb[0].mxu0
    %v430 = vadd.f32 0.0, %v429
    %v431 = vpop.f32.mrb[0].mxu0
    %v432 = vadd.f32 0.0, %v431
    %v433 = vpop.f32.mrb[0].mxu0
    %v434 = vadd.f32 0.0, %v433
    %v435 = vpop.f32.mrb[0].mxu0
    %v436 = vadd.f32 0.0, %v435
    %437 = vmatprep.mubr.bf16.mxu0 0
    %438 = vmatmul.mubr.bf16.gmra.mrb[0].mxu0 %v337
    %v439 = vpop.f32.mrb[0].mxu0
    %v440 = vadd.f32 0.0, %v439
    %v441 = vpop.f32.mrb[0].mxu0
    %v442 = vadd.f32 0.0, %v441
    %v443 = vpop.f32.mrb[0].mxu0
    %v444 = vadd.f32 0.0, %v443
    %v445 = vpop.f32.mrb[0].mxu0
    %v446 = vadd.f32 0.0, %v445
    %447 = vmatprep.mubr.bf16.mxu0 0
    %448 = vmatmul.mubr.bf16.gmra.mrb[0].mxu0 %v340
    %v449 = vpop.f32.mrb[0].mxu0
    %v450 = vadd.f32 0.0, %v449
    %v451 = vpop.f32.mrb[0].mxu0
    %v452 = vadd.f32 0.0, %v451
    %v453 = vpop.f32.mrb[0].mxu0
    %v454 = vadd.f32 0.0, %v453
    %v455 = vpop.f32.mrb[0].mxu0
    %v456 = vadd.f32 0.0, %v455
    %457 = vmatprep.mubr.bf16.mxu0 0
    %458 = vmatmul.mubr.bf16.gmra.mrb[0].mxu0 %v343
    %v459 = vpop.f32.mrb[0].mxu0
    %v460 = vadd.f32 0.0, %v459
    %v461 = vpop.f32.mrb[0].mxu0
    %v462 = vadd.f32 0.0, %v461
    %v463 = vpop.f32.mrb[0].mxu0
    %v464 = vadd.f32 0.0, %v463
    %v465 = vpop.f32.mrb[0].mxu0
    %v466 = vadd.f32 0.0, %v465
    %467 = vmatprep.mubr.bf16.mxu0 0
    %468 = vmatmul.mubr.bf16.gmra.mrb[0].mxu0 %v346
    %v469 = vpop.f32.mrb[0].mxu0
    %v470 = vadd.f32 0.0, %v469
    %v471 = vpop.f32.mrb[0].mxu0
    %v472 = vadd.f32 0.0, %v471
    %v473 = vpop.f32.mrb[0].mxu0
    %v474 = vadd.f32 0.0, %v473
    %v475 = vpop.f32.mrb[0].mxu0
    %v476 = vadd.f32 0.0, %v475
    %477 = vmatprep.mubr.bf16.mxu0 0
    %478 = vmatmul.mubr.bf16.gmra.mrb[0].mxu0 %v349
    %v479 = vpop.f32.mrb[0].mxu0
    %v480 = vadd.f32 0.0, %v479
    %v481 = vpop.f32.mrb[0].mxu0
    %v482 = vadd.f32 0.0, %v481
    %v483 = vpop.f32.mrb[0].mxu0
    %v484 = vadd.f32 0.0, %v483
    %v485 = vpop.f32.mrb[0].mxu0
    %v486 = vadd.f32 0.0, %v485
    %487 = vmatprep.mubr.bf16.mxu0 0
    %488 = vmatmul.mubr.bf16.gmra.mrb[0].mxu0 %v352
    %v489 = vpop.f32.mrb[0].mxu0
    %v490 = vadd.f32 0.0, %v489
    %v491 = vpop.f32.mrb[0].mxu0
    %v492 = vadd.f32 0.0, %v491
    %v493 = vpop.f32.mrb[0].mxu0
    %v494 = vadd.f32 0.0, %v493
    %v495 = vpop.f32.mrb[0].mxu0
    %v496 = vadd.f32 0.0, %v495
    %497 = vmatprep.mubr.bf16.mxu0 0
    %498 = vmatmul.mubr.bf16.gmra.mrb[0].mxu0 %v355
    %v499 = vpop.f32.mrb[0].mxu0
    %v500 = vadd.f32 0.0, %v499
    %v501 = vpop.f32.mrb[0].mxu0
    %v502 = vadd.f32 0.0, %v501
    %v503 = vpop.f32.mrb[0].mxu0
    %v504 = vadd.f32 0.0, %v503
    %v505 = vpop.f32.mrb[0].mxu0
    %v506 = vadd.f32 0.0, %v505
    %507 = vmatprep.mubr.bf16.mxu0 0
    %508 = vmatmul.mubr.bf16.gmra.mrb[0].mxu0 %v358
    %v509 = vpop.f32.mrb[0].mxu0
    %v510 = vadd.f32 0.0, %v509
    %v511 = vpop.f32.mrb[0].mxu0
    %v512 = vadd.f32 0.0, %v511
    %v513 = vpop.f32.mrb[0].mxu0
    %v514 = vadd.f32 0.0, %v513
    %v515 = vpop.f32.mrb[0].mxu0
    %v516 = vadd.f32 0.0, %v515
    %517 = vmatprep.mubr.bf16.mxu0 0
    %518 = vmatmul.mubr.bf16.gmra.mrb[0].mxu0 %v361
    %v519 = vpop.f32.mrb[0].mxu0
    %v520 = vadd.f32 0.0, %v519
    %v521 = vpop.f32.mrb[0].mxu0
    %v522 = vadd.f32 0.0, %v521
    %v523 = vpop.f32.mrb[0].mxu0
    %v524 = vadd.f32 0.0, %v523
    %v525 = vpop.f32.mrb[0].mxu0
    %v526 = vadd.f32 0.0, %v525
    %527 = vmatprep.mubr.bf16.mxu0 0
    %528 = vmatmul.mubr.bf16.gmra.mrb[0].mxu0 %v364
    %v529 = vpop.f32.mrb[0].mxu0
    %v530 = vadd.f32 0.0, %v529
    %v531 = vpop.f32.mrb[0].mxu0
    %v532 = vadd.f32 0.0, %v531
    %v533 = vpop.f32.mrb[0].mxu0
    %v534 = vadd.f32 0.0, %v533
    %v535 = vpop.f32.mrb[0].mxu0
    %v536 = vadd.f32 0.0, %v535
    %537 = vmatprep.mubr.bf16.mxu0 0
    %538 = vmatmul.mubr.bf16.gmra.mrb[0].mxu0 %v367
    %v539 = vpop.f32.mrb[0].mxu0
    %v540 = vadd.f32 0.0, %v539
    %v541 = vpop.f32.mrb[0].mxu0
    %v542 = vadd.f32 0.0, %v541
    %v543 = vpop.f32.mrb[0].mxu0
    %v544 = vadd.f32 0.0, %v543
    %v545 = vpop.f32.mrb[0].mxu0
    %v546 = vadd.f32 0.0, %v545
    %547 = vmatprep.mubr.bf16.mxu0 0
    %548 = vmatmul.mubr.bf16.gmra.mrb[0].mxu0 %v370
    %v549 = vpop.f32.mrb[0].mxu0
    %v550 = vadd.f32 0.0, %v549
    %v551 = vpop.f32.mrb[0].mxu0
    %v552 = vadd.f32 0.0, %v551
    %v553 = vpop.f32.mrb[0].mxu0
    %v554 = vadd.f32 0.0, %v553
    %v555 = vpop.f32.mrb[0].mxu0
    %v556 = vadd.f32 0.0, %v555
    %557 = vmatprep.mubr.bf16.mxu0 0
    %558 = vmatmul.mubr.bf16.gmra.mrb[0].mxu0 %v373
    %v559 = vpop.f32.mrb[0].mxu0
    %v560 = vadd.f32 0.0, %v559
    %v561 = vpop.f32.mrb[0].mxu0
    %v562 = vadd.f32 0.0, %v561
    %v563 = vpop.f32.mrb[0].mxu0
    %v564 = vadd.f32 0.0, %v563
    %v565 = vpop.f32.mrb[0].mxu0
    %v566 = vadd.f32 0.0, %v565
    %567 = vdwg.mxu0
    %568 = vmatprep.subr.bf16.mxu0 %v265
    %569 = vmatpush1.bf16.msra.mxu0 %v264
    %570 = vmatprep.subr.bf16.mxu0 %v273
    %571 = vmatpush1.bf16.msra.mxu0 %v272
    %572 = vmatprep.subr.bf16.mxu0 %v281
    %573 = vmatpush1.bf16.msra.mxu0 %v280
    %574 = vmatprep.subr.bf16.mxu0 %v289
    %575 = vmatpush1.bf16.msra.mxu0 %v288
    %576 = vmatprep.subr.bf16.mxu0 0
    %577 = vmatpush1.bf16.msra.mxu0 0
    %578 = vmatprep.subr.bf16.mxu0 0
    %579 = vmatpush1.bf16.msra.mxu0 0
    %580 = vmatprep.subr.bf16.mxu0 0
    %581 = vmatpush1.bf16.msra.mxu0 0
    %582 = vmatprep.subr.bf16.mxu0 0
    %583 = vmatpush1.bf16.msra.mxu0 0
    %584 = vmatprep.subr.bf16.mxu0 0
    %585 = vmatpush1.bf16.msra.mxu0 0
    %586 = vmatprep.subr.bf16.mxu0 0
    %587 = vmatpush1.bf16.msra.mxu0 0
    %588 = vmatprep.subr.bf16.mxu0 0
    %589 = vmatpush1.bf16.msra.mxu0 0
    %590 = vmatprep.subr.bf16.mxu0 0
    %591 = vmatpush1.bf16.msra.mxu0 0
    %592 = vmatprep.subr.bf16.mxu0 0
    %593 = vmatpush1.bf16.msra.mxu0 0
    %594 = vmatprep.subr.bf16.mxu0 0
    %595 = vmatpush1.bf16.msra.mxu0 0
    %596 = vmatprep.subr.bf16.mxu0 0
    %597 = vmatpush1.bf16.msra.mxu0 0
    %598 = vmatprep.subr.bf16.mxu0 0
    %599 = vmatpush1.bf16.msra.mxu0 0
    %600 = vmatprep.mubr.bf16.mxu0 0
    %601 = vmatmul.mubr.bf16.gmra.mrb[0].mxu0 %v328
    %v602 = vpop.f32.mrb[0].mxu0
    %v603 = vadd.f32 0.0, %v602
    %v604 = vpop.f32.mrb[0].mxu0
    %v605 = vadd.f32 0.0, %v604
    %v606 = vpop.f32.mrb[0].mxu0
    %v607 = vadd.f32 0.0, %v606
    %v608 = vpop.f32.mrb[0].mxu0
    %v609 = vadd.f32 0.0, %v608
    %610 = vmatprep.mubr.bf16.mxu0 0
    %611 = vmatmul.mubr.bf16.gmra.mrb[0].mxu0 %v331
    %v612 = vpop.f32.mrb[0].mxu0
    %v613 = vadd.f32 0.0, %v612
    %v614 = vpop.f32.mrb[0].mxu0
    %v615 = vadd.f32 0.0, %v614
    %v616 = vpop.f32.mrb[0].mxu0
    %v617 = vadd.f32 0.0, %v616
    %v618 = vpop.f32.mrb[0].mxu0
    %v619 = vadd.f32 0.0, %v618
    %620 = vmatprep.mubr.bf16.mxu0 0
    %621 = vmatmul.mubr.bf16.gmra.mrb[0].mxu0 %v334
    %v622 = vpop.f32.mrb[0].mxu0
    %v623 = vadd.f32 0.0, %v622
    %v624 = vpop.f32.mrb[0].mxu0
    %v625 = vadd.f32 0.0, %v624
    %v626 = vpop.f32.mrb[0].mxu0
    %v627 = vadd.f32 0.0, %v626
    %v628 = vpop.f32.mrb[0].mxu0
    %v629 = vadd.f32 0.0, %v628
    %630 = vmatprep.mubr.bf16.mxu0 0
    %631 = vmatmul.mubr.bf16.gmra.mrb[0].mxu0 %v337
    %v632 = vpop.f32.mrb[0].mxu0
    %v633 = vadd.f32 0.0, %v632
    %v634 = vpop.f32.mrb[0].mxu0
    %v635 = vadd.f32 0.0, %v634
    %v636 = vpop.f32.mrb[0].mxu0
    %v637 = vadd.f32 0.0, %v636
    %v638 = vpop.f32.mrb[0].mxu0
    %v639 = vadd.f32 0.0, %v638
    %640 = vmatprep.mubr.bf16.mxu0 0
    %641 = vmatmul.mubr.bf16.gmra.mrb[0].mxu0 %v340
    %v642 = vpop.f32.mrb[0].mxu0
    %v643 = vadd.f32 0.0, %v642
    %v644 = vpop.f32.mrb[0].mxu0
    %v645 = vadd.f32 0.0, %v644
    %v646 = vpop.f32.mrb[0].mxu0
    %v647 = vadd.f32 0.0, %v646
    %v648 = vpop.f32.mrb[0].mxu0
    %v649 = vadd.f32 0.0, %v648
    %650 = vmatprep.mubr.bf16.mxu0 0
    %651 = vmatmul.mubr.bf16.gmra.mrb[0].mxu0 %v343
    %v652 = vpop.f32.mrb[0].mxu0
    %v653 = vadd.f32 0.0, %v652
    %v654 = vpop.f32.mrb[0].mxu0
    %v655 = vadd.f32 0.0, %v654
    %v656 = vpop.f32.mrb[0].mxu0
    %v657 = vadd.f32 0.0, %v656
    %v658 = vpop.f32.mrb[0].mxu0
    %v659 = vadd.f32 0.0, %v658
    %660 = vmatprep.mubr.bf16.mxu0 0
    %661 = vmatmul.mubr.bf16.gmra.mrb[0].mxu0 %v346
    %v662 = vpop.f32.mrb[0].mxu0
    %v663 = vadd.f32 0.0, %v662
    %v664 = vpop.f32.mrb[0].mxu0
    %v665 = vadd.f32 0.0, %v664
    %v666 = vpop.f32.mrb[0].mxu0
    %v667 = vadd.f32 0.0, %v666
    %v668 = vpop.f32.mrb[0].mxu0
    %v669 = vadd.f32 0.0, %v668
    %670 = vmatprep.mubr.bf16.mxu0 0
    %671 = vmatmul.mubr.bf16.gmra.mrb[0].mxu0 %v349
    %v672 = vpop.f32.mrb[0].mxu0
    %v673 = vadd.f32 0.0, %v672
    %v674 = vpop.f32.mrb[0].mxu0
    %v675 = vadd.f32 0.0, %v674
    %v676 = vpop.f32.mrb[0].mxu0
    %v677 = vadd.f32 0.0, %v676
    %v678 = vpop.f32.mrb[0].mxu0
    %v679 = vadd.f32 0.0, %v678
    %680 = vmatprep.mubr.bf16.mxu0 0
    %681 = vmatmul.mubr.bf16.gmra.mrb[0].mxu0 %v352
    %v682 = vpop.f32.mrb[0].mxu0
    %v683 = vadd.f32 0.0, %v682
    %v684 = vpop.f32.mrb[0].mxu0
    %v685 = vadd.f32 0.0, %v684
    %v686 = vpop.f32.mrb[0].mxu0
    %v687 = vadd.f32 0.0, %v686
    %v688 = vpop.f32.mrb[0].mxu0
    %v689 = vadd.f32 0.0, %v688
    %690 = vmatprep.mubr.bf16.mxu0 0
    %691 = vmatmul.mubr.bf16.gmra.mrb[0].mxu0 %v355
    %v692 = vpop.f32.mrb[0].mxu0
    %v693 = vadd.f32 0.0, %v692
    %v694 = vpop.f32.mrb[0].mxu0
    %v695 = vadd.f32 0.0, %v694
    %v696 = vpop.f32.mrb[0].mxu0
    %v697 = vadd.f32 0.0, %v696
    %v698 = vpop.f32.mrb[0].mxu0
    %v699 = vadd.f32 0.0, %v698
    %700 = vmatprep.mubr.bf16.mxu0 0
    %701 = vmatmul.mubr.bf16.gmra.mrb[0].mxu0 %v358
    %v702 = vpop.f32.mrb[0].mxu0
    %v703 = vadd.f32 0.0, %v702
    %v704 = vpop.f32.mrb[0].mxu0
    %v705 = vadd.f32 0.0, %v704
    %v706 = vpop.f32.mrb[0].mxu0
    %v707 = vadd.f32 0.0, %v706
    %v708 = vpop.f32.mrb[0].mxu0
    %v709 = vadd.f32 0.0, %v708
    %710 = vmatprep.mubr.bf16.mxu0 0
    %711 = vmatmul.mubr.bf16.gmra.mrb[0].mxu0 %v361
    %v712 = vpop.f32.mrb[0].mxu0
    %v713 = vadd.f32 0.0, %v712
    %v714 = vpop.f32.mrb[0].mxu0
    %v715 = vadd.f32 0.0, %v714
    %v716 = vpop.f32.mrb[0].mxu0
    %v717 = vadd.f32 0.0, %v716
    %v718 = vpop.f32.mrb[0].mxu0
    %v719 = vadd.f32 0.0, %v718
    %720 = vmatprep.mubr.bf16.mxu0 0
    %721 = vmatmul.mubr.bf16.gmra.mrb[0].mxu0 %v364
    %v722 = vpop.f32.mrb[0].mxu0
    %v723 = vadd.f32 0.0, %v722
    %v724 = vpop.f32.mrb[0].mxu0
    %v725 = vadd.f32 0.0, %v724
    %v726 = vpop.f32.mrb[0].mxu0
    %v727 = vadd.f32 0.0, %v726
    %v728 = vpop.f32.mrb[0].mxu0
    %v729 = vadd.f32 0.0, %v728
    %730 = vmatprep.mubr.bf16.mxu0 0
    %731 = vmatmul.mubr.bf16.gmra.mrb[0].mxu0 %v367
    %v732 = vpop.f32.mrb[0].mxu0
    %v733 = vadd.f32 0.0, %v732
    %v734 = vpop.f32.mrb[0].mxu0
    %v735 = vadd.f32 0.0, %v734
    %v736 = vpop.f32.mrb[0].mxu0
    %v737 = vadd.f32 0.0, %v736
    %v738 = vpop.f32.mrb[0].mxu0
    %v739 = vadd.f32 0.0, %v738
    %740 = vmatprep.mubr.bf16.mxu0 0
    %741 = vmatmul.mubr.bf16.gmra.mrb[0].mxu0 %v370
    %v742 = vpop.f32.mrb[0].mxu0
    %v743 = vadd.f32 0.0, %v742
    %v744 = vpop.f32.mrb[0].mxu0
    %v745 = vadd.f32 0.0, %v744
    %v746 = vpop.f32.mrb[0].mxu0
    %v747 = vadd.f32 0.0, %v746
    %v748 = vpop.f32.mrb[0].mxu0
    %v749 = vadd.f32 0.0, %v748
    %750 = vmatprep.mubr.bf16.mxu0 0
    %751 = vmatmul.mubr.bf16.gmra.mrb[0].mxu0 %v373
    %v752 = vpop.f32.mrb[0].mxu0
    %v753 = vadd.f32 0.0, %v752
    %v754 = vpop.f32.mrb[0].mxu0
    %v755 = vadd.f32 0.0, %v754
    %v756 = vpop.f32.mrb[0].mxu0
    %v757 = vadd.f32 0.0, %v756
    %v758 = vpop.f32.mrb[0].mxu0
    %v759 = vadd.f32 0.0, %v758
    %760 = vdwg.mxu0
    %761 = vmatprep.subr.bf16.mxu0 %v267
    %762 = vmatpush1.bf16.msra.mxu0 %v266
    %763 = vmatprep.subr.bf16.mxu0 %v275
    %764 = vmatpush1.bf16.msra.mxu0 %v274
    %765 = vmatprep.subr.bf16.mxu0 %v283
    %766 = vmatpush1.bf16.msra.mxu0 %v282
    %767 = vmatprep.subr.bf16.mxu0 %v291
    %768 = vmatpush1.bf16.msra.mxu0 %v290
    %769 = vmatprep.subr.bf16.mxu0 0
    %770 = vmatpush1.bf16.msra.mxu0 0
    %771 = vmatprep.subr.bf16.mxu0 0
    %772 = vmatpush1.bf16.msra.mxu0 0
    %773 = vmatprep.subr.bf16.mxu0 0
    %774 = vmatpush1.bf16.msra.mxu0 0
    %775 = vmatprep.subr.bf16.mxu0 0
    %776 = vmatpush1.bf16.msra.mxu0 0
    %777 = vmatprep.subr.bf16.mxu0 0
    %778 = vmatpush1.bf16.msra.mxu0 0
    %779 = vmatprep.subr.bf16.mxu0 0
    %780 = vmatpush1.bf16.msra.mxu0 0
    %781 = vmatprep.subr.bf16.mxu0 0
    %782 = vmatpush1.bf16.msra.mxu0 0
    %783 = vmatprep.subr.bf16.mxu0 0
    %784 = vmatpush1.bf16.msra.mxu0 0
    %785 = vmatprep.subr.bf16.mxu0 0
    %786 = vmatpush1.bf16.msra.mxu0 0
    %787 = vmatprep.subr.bf16.mxu0 0
    %788 = vmatpush1.bf16.msra.mxu0 0
    %789 = vmatprep.subr.bf16.mxu0 0
    %790 = vmatpush1.bf16.msra.mxu0 0
    %791 = vmatprep.subr.bf16.mxu0 0
    %792 = vmatpush1.bf16.msra.mxu0 0
    %793 = vmatprep.mubr.bf16.mxu0 0
    %794 = vmatmul.mubr.bf16.gmra.mrb[0].mxu0 %v328
    %v795 = vpop.f32.mrb[0].mxu0
    %v796 = vadd.f32 0.0, %v795
    %v797 = vpop.f32.mrb[0].mxu0
    %v798 = vadd.f32 0.0, %v797
    %v799 = vpop.f32.mrb[0].mxu0
    %v800 = vadd.f32 0.0, %v799
    %v801 = vpop.f32.mrb[0].mxu0
    %v802 = vadd.f32 0.0, %v801
    %803 = vmatprep.mubr.bf16.mxu0 0
    %804 = vmatmul.mubr.bf16.gmra.mrb[0].mxu0 %v331
    %v805 = vpop.f32.mrb[0].mxu0
    %v806 = vadd.f32 0.0, %v805
    %v807 = vpop.f32.mrb[0].mxu0
    %v808 = vadd.f32 0.0, %v807
    %v809 = vpop.f32.mrb[0].mxu0
    %v810 = vadd.f32 0.0, %v809
    %v811 = vpop.f32.mrb[0].mxu0
    %v812 = vadd.f32 0.0, %v811
    %813 = vmatprep.mubr.bf16.mxu0 0
    %814 = vmatmul.mubr.bf16.gmra.mrb[0].mxu0 %v334
    %v815 = vpop.f32.mrb[0].mxu0
    %v816 = vadd.f32 0.0, %v815
    %v817 = vpop.f32.mrb[0].mxu0
    %v818 = vadd.f32 0.0, %v817
    %v819 = vpop.f32.mrb[0].mxu0
    %v820 = vadd.f32 0.0, %v819
    %v821 = vpop.f32.mrb[0].mxu0
    %v822 = vadd.f32 0.0, %v821
    %823 = vmatprep.mubr.bf16.mxu0 0
    %824 = vmatmul.mubr.bf16.gmra.mrb[0].mxu0 %v337
    %v825 = vpop.f32.mrb[0].mxu0
    %v826 = vadd.f32 0.0, %v825
    %v827 = vpop.f32.mrb[0].mxu0
    %v828 = vadd.f32 0.0, %v827
    %v829 = vpop.f32.mrb[0].mxu0
    %v830 = vadd.f32 0.0, %v829
    %v831 = vpop.f32.mrb[0].mxu0
    %v832 = vadd.f32 0.0, %v831
    %833 = vmatprep.mubr.bf16.mxu0 0
    %834 = vmatmul.mubr.bf16.gmra.mrb[0].mxu0 %v340
    %v835 = vpop.f32.mrb[0].mxu0
    %v836 = vadd.f32 0.0, %v835
    %v837 = vpop.f32.mrb[0].mxu0
    %v838 = vadd.f32 0.0, %v837
    %v839 = vpop.f32.mrb[0].mxu0
    %v840 = vadd.f32 0.0, %v839
    %v841 = vpop.f32.mrb[0].mxu0
    %v842 = vadd.f32 0.0, %v841
    %843 = vmatprep.mubr.bf16.mxu0 0
    %844 = vmatmul.mubr.bf16.gmra.mrb[0].mxu0 %v343
    %v845 = vpop.f32.mrb[0].mxu0
    %v846 = vadd.f32 0.0, %v845
    %v847 = vpop.f32.mrb[0].mxu0
    %v848 = vadd.f32 0.0, %v847
    %v849 = vpop.f32.mrb[0].mxu0
    %v850 = vadd.f32 0.0, %v849
    %v851 = vpop.f32.mrb[0].mxu0
    %v852 = vadd.f32 0.0, %v851
    %853 = vmatprep.mubr.bf16.mxu0 0
    %854 = vmatmul.mubr.bf16.gmra.mrb[0].mxu0 %v346
    %v855 = vpop.f32.mrb[0].mxu0
    %v856 = vadd.f32 0.0, %v855
    %v857 = vpop.f32.mrb[0].mxu0
    %v858 = vadd.f32 0.0, %v857
    %v859 = vpop.f32.mrb[0].mxu0
    %v860 = vadd.f32 0.0, %v859
    %v861 = vpop.f32.mrb[0].mxu0
    %v862 = vadd.f32 0.0, %v861
    %863 = vmatprep.mubr.bf16.mxu0 0
    %864 = vmatmul.mubr.bf16.gmra.mrb[0].mxu0 %v349
    %v865 = vpop.f32.mrb[0].mxu0
    %v866 = vadd.f32 0.0, %v865
    %v867 = vpop.f32.mrb[0].mxu0
    %v868 = vadd.f32 0.0, %v867
    %v869 = vpop.f32.mrb[0].mxu0
    %v870 = vadd.f32 0.0, %v869
    %v871 = vpop.f32.mrb[0].mxu0
    %v872 = vadd.f32 0.0, %v871
    %873 = vmatprep.mubr.bf16.mxu0 0
    %874 = vmatmul.mubr.bf16.gmra.mrb[0].mxu0 %v352
    %v875 = vpop.f32.mrb[0].mxu0
    %v876 = vadd.f32 0.0, %v875
    %v877 = vpop.f32.mrb[0].mxu0
    %v878 = vadd.f32 0.0, %v877
    %v879 = vpop.f32.mrb[0].mxu0
    %v880 = vadd.f32 0.0, %v879
    %v881 = vpop.f32.mrb[0].mxu0
    %v882 = vadd.f32 0.0, %v881
    %883 = vmatprep.mubr.bf16.mxu0 0
    %884 = vmatmul.mubr.bf16.gmra.mrb[0].mxu0 %v355
    %v885 = vpop.f32.mrb[0].mxu0
    %v886 = vadd.f32 0.0, %v885
    %v887 = vpop.f32.mrb[0].mxu0
    %v888 = vadd.f32 0.0, %v887
    %v889 = vpop.f32.mrb[0].mxu0
    %v890 = vadd.f32 0.0, %v889
    %v891 = vpop.f32.mrb[0].mxu0
    %v892 = vadd.f32 0.0, %v891
    %893 = vmatprep.mubr.bf16.mxu0 0
    %894 = vmatmul.mubr.bf16.gmra.mrb[0].mxu0 %v358
    %v895 = vpop.f32.mrb[0].mxu0
    %v896 = vadd.f32 0.0, %v895
    %v897 = vpop.f32.mrb[0].mxu0
    %v898 = vadd.f32 0.0, %v897
    %v899 = vpop.f32.mrb[0].mxu0
    %v900 = vadd.f32 0.0, %v899
    %v901 = vpop.f32.mrb[0].mxu0
    %v902 = vadd.f32 0.0, %v901
    %903 = vmatprep.mubr.bf16.mxu0 0
    %904 = vmatmul.mubr.bf16.gmra.mrb[0].mxu0 %v361
    %v905 = vpop.f32.mrb[0].mxu0
    %v906 = vadd.f32 0.0, %v905
    %v907 = vpop.f32.mrb[0].mxu0
    %v908 = vadd.f32 0.0, %v907
    %v909 = vpop.f32.mrb[0].mxu0
    %v910 = vadd.f32 0.0, %v909
    %v911 = vpop.f32.mrb[0].mxu0
    %v912 = vadd.f32 0.0, %v911
    %913 = vmatprep.mubr.bf16.mxu0 0
    %914 = vmatmul.mubr.bf16.gmra.mrb[0].mxu0 %v364
    %v915 = vpop.f32.mrb[0].mxu0
    %v916 = vadd.f32 0.0, %v915
    %v917 = vpop.f32.mrb[0].mxu0
    %v918 = vadd.f32 0.0, %v917
    %v919 = vpop.f32.mrb[0].mxu0
    %v920 = vadd.f32 0.0, %v919
    %v921 = vpop.f32.mrb[0].mxu0
    %v922 = vadd.f32 0.0, %v921
    %923 = vmatprep.mubr.bf16.mxu0 0
    %924 = vmatmul.mubr.bf16.gmra.mrb[0].mxu0 %v367
    %v925 = vpop.f32.mrb[0].mxu0
    %v926 = vadd.f32 0.0, %v925
    %v927 = vpop.f32.mrb[0].mxu0
    %v928 = vadd.f32 0.0, %v927
    %v929 = vpop.f32.mrb[0].mxu0
    %v930 = vadd.f32 0.0, %v929
    %v931 = vpop.f32.mrb[0].mxu0
    %v932 = vadd.f32 0.0, %v931
    %933 = vmatprep.mubr.bf16.mxu0 0
    %934 = vmatmul.mubr.bf16.gmra.mrb[0].mxu0 %v370
    %v935 = vpop.f32.mrb[0].mxu0
    %v936 = vadd.f32 0.0, %v935
    %v937 = vpop.f32.mrb[0].mxu0
    %v938 = vadd.f32 0.0, %v937
    %v939 = vpop.f32.mrb[0].mxu0
    %v940 = vadd.f32 0.0, %v939
    %v941 = vpop.f32.mrb[0].mxu0
    %v942 = vadd.f32 0.0, %v941
    %943 = vmatprep.mubr.bf16.mxu0 0
    %944 = vmatmul.mubr.bf16.gmra.mrb[0].mxu0 %v373
    %v945 = vpop.f32.mrb[0].mxu0
    %v946 = vadd.f32 0.0, %v945
    %v947 = vpop.f32.mrb[0].mxu0
    %v948 = vadd.f32 0.0, %v947
    %v949 = vpop.f32.mrb[0].mxu0
    %v950 = vadd.f32 0.0, %v949
    %v951 = vpop.f32.mrb[0].mxu0
    %v952 = vadd.f32 0.0, %v951
    %953 = vdwg.mxu0
    %954 = vmatprep.subr.bf16.mxu0 %v269
    %955 = vmatpush1.bf16.msra.mxu0 %v268
    %956 = vmatprep.subr.bf16.mxu0 %v277
    %957 = vmatpush1.bf16.msra.mxu0 %v276
    %958 = vmatprep.subr.bf16.mxu0 %v285
    %959 = vmatpush1.bf16.msra.mxu0 %v284
    %960 = vmatprep.subr.bf16.mxu0 %v293
    %961 = vmatpush1.bf16.msra.mxu0 %v292
    %962 = vmatprep.subr.bf16.mxu0 0
    %963 = vmatpush1.bf16.msra.mxu0 0
    %964 = vmatprep.subr.bf16.mxu0 0
    %965 = vmatpush1.bf16.msra.mxu0 0
    %966 = vmatprep.subr.bf16.mxu0 0
    %967 = vmatpush1.bf16.msra.mxu0 0
    %968 = vmatprep.subr.bf16.mxu0 0
    %969 = vmatpush1.bf16.msra.mxu0 0
    %970 = vmatprep.subr.bf16.mxu0 0
    %971 = vmatpush1.bf16.msra.mxu0 0
    %972 = vmatprep.subr.bf16.mxu0 0
    %973 = vmatpush1.bf16.msra.mxu0 0
    %974 = vmatprep.subr.bf16.mxu0 0
    %975 = vmatpush1.bf16.msra.mxu0 0
    %976 = vmatprep.subr.bf16.mxu0 0
    %977 = vmatpush1.bf16.msra.mxu0 0
    %978 = vmatprep.subr.bf16.mxu0 0
    %979 = vmatpush1.bf16.msra.mxu0 0
    %980 = vmatprep.subr.bf16.mxu0 0
    %981 = vmatpush1.bf16.msra.mxu0 0
    %982 = vmatprep.subr.bf16.mxu0 0
    %983 = vmatpush1.bf16.msra.mxu0 0
    %984 = vmatprep.subr.bf16.mxu0 0
    %985 = vmatpush1.bf16.msra.mxu0 0
    %986 = vmatprep.mubr.bf16.mxu0 0
    %987 = vmatmul.mubr.bf16.gmra.mrb[0].mxu0 %v328
    %v988 = vpop.f32.mrb[0].mxu0
    %v989 = vadd.f32 0.0, %v988
    %v990 = vpop.f32.mrb[0].mxu0
    %v991 = vadd.f32 0.0, %v990
    %v992 = vpop.f32.mrb[0].mxu0
    %v993 = vadd.f32 0.0, %v992
    %v994 = vpop.f32.mrb[0].mxu0
    %v995 = vadd.f32 0.0, %v994
    %996 = vmatprep.mubr.bf16.mxu0 0
    %997 = vmatmul.mubr.bf16.gmra.mrb[0].mxu0 %v331
    %v998 = vpop.f32.mrb[0].mxu0
    %v999 = vadd.f32 0.0, %v998
    %v1000 = vpop.f32.mrb[0].mxu0
    %v1001 = vadd.f32 0.0, %v1000
    %v1002 = vpop.f32.mrb[0].mxu0
    %v1003 = vadd.f32 0.0, %v1002
    %v1004 = vpop.f32.mrb[0].mxu0
    %v1005 = vadd.f32 0.0, %v1004
    %1006 = vmatprep.mubr.bf16.mxu0 0
    %1007 = vmatmul.mubr.bf16.gmra.mrb[0].mxu0 %v334
    %v1008 = vpop.f32.mrb[0].mxu0
    %v1009 = vadd.f32 0.0, %v1008
    %v1010 = vpop.f32.mrb[0].mxu0
    %v1011 = vadd.f32 0.0, %v1010
    %v1012 = vpop.f32.mrb[0].mxu0
    %v1013 = vadd.f32 0.0, %v1012
    %v1014 = vpop.f32.mrb[0].mxu0
    %v1015 = vadd.f32 0.0, %v1014
    %1016 = vmatprep.mubr.bf16.mxu0 0
    %1017 = vmatmul.mubr.bf16.gmra.mrb[0].mxu0 %v337
    %v1018 = vpop.f32.mrb[0].mxu0
    %v1019 = vadd.f32 0.0, %v1018
    %v1020 = vpop.f32.mrb[0].mxu0
    %v1021 = vadd.f32 0.0, %v1020
    %v1022 = vpop.f32.mrb[0].mxu0
    %v1023 = vadd.f32 0.0, %v1022
    %v1024 = vpop.f32.mrb[0].mxu0
    %v1025 = vadd.f32 0.0, %v1024
    %1026 = vmatprep.mubr.bf16.mxu0 0
    %1027 = vmatmul.mubr.bf16.gmra.mrb[0].mxu0 %v340
    %v1028 = vpop.f32.mrb[0].mxu0
    %v1029 = vadd.f32 0.0, %v1028
    %v1030 = vpop.f32.mrb[0].mxu0
    %v1031 = vadd.f32 0.0, %v1030
    %v1032 = vpop.f32.mrb[0].mxu0
    %v1033 = vadd.f32 0.0, %v1032
    %v1034 = vpop.f32.mrb[0].mxu0
    %v1035 = vadd.f32 0.0, %v1034
    %1036 = vmatprep.mubr.bf16.mxu0 0
    %1037 = vmatmul.mubr.bf16.gmra.mrb[0].mxu0 %v343
    %v1038 = vpop.f32.mrb[0].mxu0
    %v1039 = vadd.f32 0.0, %v1038
    %v1040 = vpop.f32.mrb[0].mxu0
    %v1041 = vadd.f32 0.0, %v1040
    %v1042 = vpop.f32.mrb[0].mxu0
    %v1043 = vadd.f32 0.0, %v1042
    %v1044 = vpop.f32.mrb[0].mxu0
    %v1045 = vadd.f32 0.0, %v1044
    %1046 = vmatprep.mubr.bf16.mxu0 0
    %1047 = vmatmul.mubr.bf16.gmra.mrb[0].mxu0 %v346
    %v1048 = vpop.f32.mrb[0].mxu0
    %v1049 = vadd.f32 0.0, %v1048
    %v1050 = vpop.f32.mrb[0].mxu0
    %v1051 = vadd.f32 0.0, %v1050
    %v1052 = vpop.f32.mrb[0].mxu0
    %v1053 = vadd.f32 0.0, %v1052
    %v1054 = vpop.f32.mrb[0].mxu0
    %v1055 = vadd.f32 0.0, %v1054
    %1056 = vmatprep.mubr.bf16.mxu0 0
    %1057 = vmatmul.mubr.bf16.gmra.mrb[0].mxu0 %v349
    %v1058 = vpop.f32.mrb[0].mxu0
    %v1059 = vadd.f32 0.0, %v1058
    %v1060 = vpop.f32.mrb[0].mxu0
    %v1061 = vadd.f32 0.0, %v1060
    %v1062 = vpop.f32.mrb[0].mxu0
    %v1063 = vadd.f32 0.0, %v1062
    %v1064 = vpop.f32.mrb[0].mxu0
    %v1065 = vadd.f32 0.0, %v1064
    %1066 = vmatprep.mubr.bf16.mxu0 0
    %1067 = vmatmul.mubr.bf16.gmra.mrb[0].mxu0 %v352
    %v1068 = vpop.f32.mrb[0].mxu0
    %v1069 = vadd.f32 0.0, %v1068
    %v1070 = vpop.f32.mrb[0].mxu0
    %v1071 = vadd.f32 0.0, %v1070
    %v1072 = vpop.f32.mrb[0].mxu0
    %v1073 = vadd.f32 0.0, %v1072
    %v1074 = vpop.f32.mrb[0].mxu0
    %v1075 = vadd.f32 0.0, %v1074
    %1076 = vmatprep.mubr.bf16.mxu0 0
    %1077 = vmatmul.mubr.bf16.gmra.mrb[0].mxu0 %v355
    %v1078 = vpop.f32.mrb[0].mxu0
    %v1079 = vadd.f32 0.0, %v1078
    %v1080 = vpop.f32.mrb[0].mxu0
    %v1081 = vadd.f32 0.0, %v1080
    %v1082 = vpop.f32.mrb[0].mxu0
    %v1083 = vadd.f32 0.0, %v1082
    %v1084 = vpop.f32.mrb[0].mxu0
    %v1085 = vadd.f32 0.0, %v1084
    %1086 = vmatprep.mubr.bf16.mxu0 0
    %1087 = vmatmul.mubr.bf16.gmra.mrb[0].mxu0 %v358
    %v1088 = vpop.f32.mrb[0].mxu0
    %v1089 = vadd.f32 0.0, %v1088
    %v1090 = vpop.f32.mrb[0].mxu0
    %v1091 = vadd.f32 0.0, %v1090
    %v1092 = vpop.f32.mrb[0].mxu0
    %v1093 = vadd.f32 0.0, %v1092
    %v1094 = vpop.f32.mrb[0].mxu0
    %v1095 = vadd.f32 0.0, %v1094
    %1096 = vmatprep.mubr.bf16.mxu0 0
    %1097 = vmatmul.mubr.bf16.gmra.mrb[0].mxu0 %v361
    %v1098 = vpop.f32.mrb[0].mxu0
    %v1099 = vadd.f32 0.0, %v1098
    %v1100 = vpop.f32.mrb[0].mxu0
    %v1101 = vadd.f32 0.0, %v1100
    %v1102 = vpop.f32.mrb[0].mxu0
    %v1103 = vadd.f32 0.0, %v1102
    %v1104 = vpop.f32.mrb[0].mxu0
    %v1105 = vadd.f32 0.0, %v1104
    %1106 = vmatprep.mubr.bf16.mxu0 0
    %1107 = vmatmul.mubr.bf16.gmra.mrb[0].mxu0 %v364
    %v1108 = vpop.f32.mrb[0].mxu0
    %v1109 = vadd.f32 0.0, %v1108
    %v1110 = vpop.f32.mrb[0].mxu0
    %v1111 = vadd.f32 0.0, %v1110
    %v1112 = vpop.f32.mrb[0].mxu0
    %v1113 = vadd.f32 0.0, %v1112
    %v1114 = vpop.f32.mrb[0].mxu0
    %v1115 = vadd.f32 0.0, %v1114
    %1116 = vmatprep.mubr.bf16.mxu0 0
    %1117 = vmatmul.mubr.bf16.gmra.mrb[0].mxu0 %v367
    %v1118 = vpop.f32.mrb[0].mxu0
    %v1119 = vadd.f32 0.0, %v1118
    %v1120 = vpop.f32.mrb[0].mxu0
    %v1121 = vadd.f32 0.0, %v1120
    %v1122 = vpop.f32.mrb[0].mxu0
    %v1123 = vadd.f32 0.0, %v1122
    %v1124 = vpop.f32.mrb[0].mxu0
    %v1125 = vadd.f32 0.0, %v1124
    %1126 = vmatprep.mubr.bf16.mxu0 0
    %1127 = vmatmul.mubr.bf16.gmra.mrb[0].mxu0 %v370
    %v1128 = vpop.f32.mrb[0].mxu0
    %v1129 = vadd.f32 0.0, %v1128
    %v1130 = vpop.f32.mrb[0].mxu0
    %v1131 = vadd.f32 0.0, %v1130
    %v1132 = vpop.f32.mrb[0].mxu0
    %v1133 = vadd.f32 0.0, %v1132
    %v1134 = vpop.f32.mrb[0].mxu0
    %v1135 = vadd.f32 0.0, %v1134
    %1136 = vmatprep.mubr.bf16.mxu0 0
    %1137 = vmatmul.mubr.bf16.gmra.mrb[0].mxu0 %v373
    %v1138 = vpop.f32.mrb[0].mxu0
    %v1139 = vadd.f32 0.0, %v1138
    %v1140 = vpop.f32.mrb[0].mxu0
    %v1141 = vadd.f32 0.0, %v1140
    %v1142 = vpop.f32.mrb[0].mxu0
    %v1143 = vadd.f32 0.0, %v1142
    %v1144 = vpop.f32.mrb[0].mxu0
    %v1145 = vadd.f32 0.0, %v1144
    %1146 = vdwg.mxu0
    %1147 = vrot.lane.b32.xlu0 %v430, 127
    %v1148 = vpop.permute.xlu0 %1147
    %1149 = vrot.lane.b32.xlu0 %v434, 127
    %v1150 = vpop.permute.xlu0 %1149
    %1151 = vrot.lane.b32.xlu0 %v440, 127
    %v1152 = vpop.permute.xlu0 %1151
    %1153 = vrot.lane.b32.xlu0 %v444, 127
    %v1154 = vpop.permute.xlu0 %1153
    %1155 = vrot.lane.b32.xlu0 %v432, 127
    %v1156 = vpop.permute.xlu0 %1155
    %1157 = vrot.lane.b32.xlu0 %v436, 127
    %v1158 = vpop.permute.xlu0 %1157
    %1159 = vrot.lane.b32.xlu0 %v442, 127
    %v1160 = vpop.permute.xlu0 %1159
    %1161 = vrot.lane.b32.xlu0 %v446, 127
    %v1162 = vpop.permute.xlu0 %1161
    %1163 = vrot.lane.b32.xlu0 %v623, 127
    %v1164 = vpop.permute.xlu0 %1163
    %1165 = vrot.lane.b32.xlu0 %v627, 127
    %v1166 = vpop.permute.xlu0 %1165
    %1167 = vrot.lane.b32.xlu0 %v633, 127
    %v1168 = vpop.permute.xlu0 %1167
    %1169 = vrot.lane.b32.xlu0 %v637, 127
    %v1170 = vpop.permute.xlu0 %1169
    %1171 = vrot.lane.b32.xlu0 %v625, 127
    %v1172 = vpop.permute.xlu0 %1171
    %1173 = vrot.lane.b32.xlu0 %v629, 127
    %v1174 = vpop.permute.xlu0 %1173
    %1175 = vrot.lane.b32.xlu0 %v635, 127
    %v1176 = vpop.permute.xlu0 %1175
    %1177 = vrot.lane.b32.xlu0 %v639, 127
    %v1178 = vpop.permute.xlu0 %1177
    %1179 = vrot.lane.b32.xlu0 %v816, 127
    %v1180 = vpop.permute.xlu0 %1179
    %1181 = vrot.lane.b32.xlu0 %v820, 127
    %v1182 = vpop.permute.xlu0 %1181
    %1183 = vrot.lane.b32.xlu0 %v826, 127
    %v1184 = vpop.permute.xlu0 %1183
    %1185 = vrot.lane.b32.xlu0 %v830, 127
    %v1186 = vpop.permute.xlu0 %1185
    %1187 = vrot.lane.b32.xlu0 %v818, 127
    %v1188 = vpop.permute.xlu0 %1187
    %1189 = vrot.lane.b32.xlu0 %v822, 127
    %v1190 = vpop.permute.xlu0 %1189
    %1191 = vrot.lane.b32.xlu0 %v828, 127
    %v1192 = vpop.permute.xlu0 %1191
    %1193 = vrot.lane.b32.xlu0 %v832, 127
    %v1194 = vpop.permute.xlu0 %1193
    %1195 = vrot.lane.b32.xlu0 %v1009, 127
    %v1196 = vpop.permute.xlu0 %1195
    %1197 = vrot.lane.b32.xlu0 %v1013, 127
    %v1198 = vpop.permute.xlu0 %1197
    %1199 = vrot.lane.b32.xlu0 %v1019, 127
    %v1200 = vpop.permute.xlu0 %1199
    %1201 = vrot.lane.b32.xlu0 %v1023, 127
    %v1202 = vpop.permute.xlu0 %1201
    %1203 = vrot.lane.b32.xlu0 %v1011, 127
    %v1204 = vpop.permute.xlu0 %1203
    %1205 = vrot.lane.b32.xlu0 %v1015, 127
    %v1206 = vpop.permute.xlu0 %1205
    %1207 = vrot.lane.b32.xlu0 %v1021, 127
    %v1208 = vpop.permute.xlu0 %1207
    %1209 = vrot.lane.b32.xlu0 %v1025, 127
    %v1210 = vpop.permute.xlu0 %1209
    %v1211 = vlaneseq
    %v1212 = vand.u32 %v1211, 127
    %vm1213 = vcmp.lt.s32.totalorder %v1212, 127
    %v1214 = vsel %vm1213, %v1196, %v1204
    %v1215 = vsel %vm1213, %v1198, %v1206
    %v1216 = vsel %vm1213, %v1200, %v1208
    %v1217 = vsel %vm1213, %v1202, %v1210
    %v1218 = vsel %vm1213, %v1188, %v1196
    %v1219 = vsel %vm1213, %v1190, %v1198
    %v1220 = vsel %vm1213, %v1192, %v1200
    %v1221 = vsel %vm1213, %v1194, %v1202
    %v1222 = vsel %vm1213, %v1180, %v1188
    %v1223 = vsel %vm1213, %v1182, %v1190
    %v1224 = vsel %vm1213, %v1184, %v1192
    %v1225 = vsel %vm1213, %v1186, %v1194
    %v1226 = vsel %vm1213, %v1172, %v1180
    %v1227 = vsel %vm1213, %v1174, %v1182
    %v1228 = vsel %vm1213, %v1176, %v1184
    %v1229 = vsel %vm1213, %v1178, %v1186
    %v1230 = vsel %vm1213, %v1164, %v1172
    %v1231 = vsel %vm1213, %v1166, %v1174
    %v1232 = vsel %vm1213, %v1168, %v1176
    %v1233 = vsel %vm1213, %v1170, %v1178
    %v1234 = vsel %vm1213, %v1156, %v1164
    %v1235 = vsel %vm1213, %v1158, %v1166
    %v1236 = vsel %vm1213, %v1160, %v1168
    %v1237 = vsel %vm1213, %v1162, %v1170
    %v1238 = vsel %vm1213, %v1148, %v1156
    %v1239 = vsel %vm1213, %v1150, %v1158
    %v1240 = vsel %vm1213, %v1152, %v1160
    %v1241 = vsel %vm1213, %v1154, %v1162
    %v1242 = vsel %vm1213, %v1204, %v1148
    %v1243 = vsel %vm1213, %v1206, %v1150
    %v1244 = vsel %vm1213, %v1208, %v1152
    %v1245 = vsel %vm1213, %v1210, %v1154
    %v1246 = vadd.f32 %v410, %v1238
    %v1247 = vadd.f32 %v412, %v1234
    %v1248 = vadd.f32 %v603, %v1230
    %v1249 = vadd.f32 %v605, %v1226
    %v1250 = vadd.f32 %v796, %v1222
    %v1251 = vadd.f32 %v798, %v1218
    %v1252 = vadd.f32 %v989, %v1214
    %v1253 = vadd.f32 %v991, %v1242
    %v1254 = vadd.f32 %v414, %v1239
    %v1255 = vadd.f32 %v416, %v1235
    %v1256 = vadd.f32 %v607, %v1231
    %v1257 = vadd.f32 %v609, %v1227
    %v1258 = vadd.f32 %v800, %v1223
    %v1259 = vadd.f32 %v802, %v1219
    %v1260 = vadd.f32 %v993, %v1215
    %v1261 = vadd.f32 %v995, %v1243
    %v1262 = vadd.f32 %v420, %v1240
    %v1263 = vadd.f32 %v422, %v1236
    %v1264 = vadd.f32 %v613, %v1232
    %v1265 = vadd.f32 %v615, %v1228
    %v1266 = vadd.f32 %v806, %v1224
    %v1267 = vadd.f32 %v808, %v1220
    %v1268 = vadd.f32 %v999, %v1216
    %v1269 = vadd.f32 %v1001, %v1244
    %v1270 = vadd.f32 %v424, %v1241
    %v1271 = vadd.f32 %v426, %v1237
    %v1272 = vadd.f32 %v617, %v1233
    %v1273 = vadd.f32 %v619, %v1229
    %v1274 = vadd.f32 %v810, %v1225
    %v1275 = vadd.f32 %v812, %v1221
    %v1276 = vadd.f32 %v1003, %v1217
    %v1277 = vadd.f32 %v1005, %v1245
    %1278 = vrot.lane.b32.xlu0 %v450, 126
    %v1279 = vpop.permute.xlu0 %1278
    %1280 = vrot.lane.b32.xlu0 %v454, 126
    %v1281 = vpop.permute.xlu0 %1280
    %1282 = vrot.lane.b32.xlu0 %v460, 126
    %v1283 = vpop.permute.xlu0 %1282
    %1284 = vrot.lane.b32.xlu0 %v464, 126
    %v1285 = vpop.permute.xlu0 %1284
    %1286 = vrot.lane.b32.xlu0 %v452, 126
    %v1287 = vpop.permute.xlu0 %1286
    %1288 = vrot.lane.b32.xlu0 %v456, 126
    %v1289 = vpop.permute.xlu0 %1288
    %1290 = vrot.lane.b32.xlu0 %v462, 126
    %v1291 = vpop.permute.xlu0 %1290
    %1292 = vrot.lane.b32.xlu0 %v466, 126
    %v1293 = vpop.permute.xlu0 %1292
    %1294 = vrot.lane.b32.xlu0 %v643, 126
    %v1295 = vpop.permute.xlu0 %1294
    %1296 = vrot.lane.b32.xlu0 %v647, 126
    %v1297 = vpop.permute.xlu0 %1296
    %1298 = vrot.lane.b32.xlu0 %v653, 126
    %v1299 = vpop.permute.xlu0 %1298
    %1300 = vrot.lane.b32.xlu0 %v657, 126
    %v1301 = vpop.permute.xlu0 %1300
    %1302 = vrot.lane.b32.xlu0 %v645, 126
    %v1303 = vpop.permute.xlu0 %1302
    %1304 = vrot.lane.b32.xlu0 %v649, 126
    %v1305 = vpop.permute.xlu0 %1304
    %1306 = vrot.lane.b32.xlu0 %v655, 126
    %v1307 = vpop.permute.xlu0 %1306
    %1308 = vrot.lane.b32.xlu0 %v659, 126
    %v1309 = vpop.permute.xlu0 %1308
    %1310 = vrot.lane.b32.xlu0 %v836, 126
    %v1311 = vpop.permute.xlu0 %1310
    %1312 = vrot.lane.b32.xlu0 %v840, 126
    %v1313 = vpop.permute.xlu0 %1312
    %1314 = vrot.lane.b32.xlu0 %v846, 126
    %v1315 = vpop.permute.xlu0 %1314
    %1316 = vrot.lane.b32.xlu0 %v850, 126
    %v1317 = vpop.permute.xlu0 %1316
    %1318 = vrot.lane.b32.xlu0 %v838, 126
    %v1319 = vpop.permute.xlu0 %1318
    %1320 = vrot.lane.b32.xlu0 %v842, 126
    %v1321 = vpop.permute.xlu0 %1320
    %1322 = vrot.lane.b32.xlu0 %v848, 126
    %v1323 = vpop.permute.xlu0 %1322
    %1324 = vrot.lane.b32.xlu0 %v852, 126
    %v1325 = vpop.permute.xlu0 %1324
    %1326 = vrot.lane.b32.xlu0 %v1029, 126
    %v1327 = vpop.permute.xlu0 %1326
    %1328 = vrot.lane.b32.xlu0 %v1033, 126
    %v1329 = vpop.permute.xlu0 %1328
    %1330 = vrot.lane.b32.xlu0 %v1039, 126
    %v1331 = vpop.permute.xlu0 %1330
    %1332 = vrot.lane.b32.xlu0 %v1043, 126
    %v1333 = vpop.permute.xlu0 %1332
    %1334 = vrot.lane.b32.xlu0 %v1031, 126
    %v1335 = vpop.permute.xlu0 %1334
    %1336 = vrot.lane.b32.xlu0 %v1035, 126
    %v1337 = vpop.permute.xlu0 %1336
    %1338 = vrot.lane.b32.xlu0 %v1041, 126
    %v1339 = vpop.permute.xlu0 %1338
    %1340 = vrot.lane.b32.xlu0 %v1045, 126
    %v1341 = vpop.permute.xlu0 %1340
    %vm1342 = vcmp.lt.s32.totalorder %v1212, 126
    %v1343 = vsel %vm1342, %v1327, %v1335
    %v1344 = vsel %vm1342, %v1329, %v1337
    %v1345 = vsel %vm1342, %v1331, %v1339
    %v1346 = vsel %vm1342, %v1333, %v1341
    %v1347 = vsel %vm1342, %v1319, %v1327
    %v1348 = vsel %vm1342, %v1321, %v1329
    %v1349 = vsel %vm1342, %v1323, %v1331
    %v1350 = vsel %vm1342, %v1325, %v1333
    %v1351 = vsel %vm1342, %v1311, %v1319
    %v1352 = vsel %vm1342, %v1313, %v1321
    %v1353 = vsel %vm1342, %v1315, %v1323
    %v1354 = vsel %vm1342, %v1317, %v1325
    %v1355 = vsel %vm1342, %v1303, %v1311
    %v1356 = vsel %vm1342, %v1305, %v1313
    %v1357 = vsel %vm1342, %v1307, %v1315
    %v1358 = vsel %vm1342, %v1309, %v1317
    %v1359 = vsel %vm1342, %v1295, %v1303
    %v1360 = vsel %vm1342, %v1297, %v1305
    %v1361 = vsel %vm1342, %v1299, %v1307
    %v1362 = vsel %vm1342, %v1301, %v1309
    %v1363 = vsel %vm1342, %v1287, %v1295
    %v1364 = vsel %vm1342, %v1289, %v1297
    %v1365 = vsel %vm1342, %v1291, %v1299
    %v1366 = vsel %vm1342, %v1293, %v1301
    %v1367 = vsel %vm1342, %v1279, %v1287
    %v1368 = vsel %vm1342, %v1281, %v1289
    %v1369 = vsel %vm1342, %v1283, %v1291
    %v1370 = vsel %vm1342, %v1285, %v1293
    %v1371 = vsel %vm1342, %v1335, %v1279
    %v1372 = vsel %vm1342, %v1337, %v1281
    %v1373 = vsel %vm1342, %v1339, %v1283
    %v1374 = vsel %vm1342, %v1341, %v1285
    %v1375 = vadd.f32 %v1246, %v1367
    %v1376 = vadd.f32 %v1247, %v1363
    %v1377 = vadd.f32 %v1248, %v1359
    %v1378 = vadd.f32 %v1249, %v1355
    %v1379 = vadd.f32 %v1250, %v1351
    %v1380 = vadd.f32 %v1251, %v1347
    %v1381 = vadd.f32 %v1252, %v1343
    %v1382 = vadd.f32 %v1253, %v1371
    %v1383 = vadd.f32 %v1254, %v1368
    %v1384 = vadd.f32 %v1255, %v1364
    %v1385 = vadd.f32 %v1256, %v1360
    %v1386 = vadd.f32 %v1257, %v1356
    %v1387 = vadd.f32 %v1258, %v1352
    %v1388 = vadd.f32 %v1259, %v1348
    %v1389 = vadd.f32 %v1260, %v1344
    %v1390 = vadd.f32 %v1261, %v1372
    %v1391 = vadd.f32 %v1262, %v1369
    %v1392 = vadd.f32 %v1263, %v1365
    %v1393 = vadd.f32 %v1264, %v1361
    %v1394 = vadd.f32 %v1265, %v1357
    %v1395 = vadd.f32 %v1266, %v1353
    %v1396 = vadd.f32 %v1267, %v1349
    %v1397 = vadd.f32 %v1268, %v1345
    %v1398 = vadd.f32 %v1269, %v1373
    %v1399 = vadd.f32 %v1270, %v1370
    %v1400 = vadd.f32 %v1271, %v1366
    %v1401 = vadd.f32 %v1272, %v1362
    %v1402 = vadd.f32 %v1273, %v1358
    %v1403 = vadd.f32 %v1274, %v1354
    %v1404 = vadd.f32 %v1275, %v1350
    %v1405 = vadd.f32 %v1276, %v1346
    %v1406 = vadd.f32 %v1277, %v1374
    %1407 = vrot.lane.b32.xlu0 %v470, 125
    %v1408 = vpop.permute.xlu0 %1407
    %1409 = vrot.lane.b32.xlu0 %v474, 125
    %v1410 = vpop.permute.xlu0 %1409
    %1411 = vrot.lane.b32.xlu0 %v480, 125
    %v1412 = vpop.permute.xlu0 %1411
    %1413 = vrot.lane.b32.xlu0 %v484, 125
    %v1414 = vpop.permute.xlu0 %1413
    %1415 = vrot.lane.b32.xlu0 %v472, 125
    %v1416 = vpop.permute.xlu0 %1415
    %1417 = vrot.lane.b32.xlu0 %v476, 125
    %v1418 = vpop.permute.xlu0 %1417
    %1419 = vrot.lane.b32.xlu0 %v482, 125
    %v1420 = vpop.permute.xlu0 %1419
    %1421 = vrot.lane.b32.xlu0 %v486, 125
    %v1422 = vpop.permute.xlu0 %1421
    %1423 = vrot.lane.b32.xlu0 %v663, 125
    %v1424 = vpop.permute.xlu0 %1423
    %1425 = vrot.lane.b32.xlu0 %v667, 125
    %v1426 = vpop.permute.xlu0 %1425
    %1427 = vrot.lane.b32.xlu0 %v673, 125
    %v1428 = vpop.permute.xlu0 %1427
    %1429 = vrot.lane.b32.xlu0 %v677, 125
    %v1430 = vpop.permute.xlu0 %1429
    %1431 = vrot.lane.b32.xlu0 %v665, 125
    %v1432 = vpop.permute.xlu0 %1431
    %1433 = vrot.lane.b32.xlu0 %v669, 125
    %v1434 = vpop.permute.xlu0 %1433
    %1435 = vrot.lane.b32.xlu0 %v675, 125
    %v1436 = vpop.permute.xlu0 %1435
    %1437 = vrot.lane.b32.xlu0 %v679, 125
    %v1438 = vpop.permute.xlu0 %1437
    %1439 = vrot.lane.b32.xlu0 %v856, 125
    %v1440 = vpop.permute.xlu0 %1439
    %1441 = vrot.lane.b32.xlu0 %v860, 125
    %v1442 = vpop.permute.xlu0 %1441
    %1443 = vrot.lane.b32.xlu0 %v866, 125
    %v1444 = vpop.permute.xlu0 %1443
    %1445 = vrot.lane.b32.xlu0 %v870, 125
    %v1446 = vpop.permute.xlu0 %1445
    %1447 = vrot.lane.b32.xlu0 %v858, 125
    %v1448 = vpop.permute.xlu0 %1447
    %1449 = vrot.lane.b32.xlu0 %v862, 125
    %v1450 = vpop.permute.xlu0 %1449
    %1451 = vrot.lane.b32.xlu0 %v868, 125
    %v1452 = vpop.permute.xlu0 %1451
    %1453 = vrot.lane.b32.xlu0 %v872, 125
    %v1454 = vpop.permute.xlu0 %1453
    %1455 = vrot.lane.b32.xlu0 %v1049, 125
    %v1456 = vpop.permute.xlu0 %1455
    %1457 = vrot.lane.b32.xlu0 %v1053, 125
    %v1458 = vpop.permute.xlu0 %1457
    %1459 = vrot.lane.b32.xlu0 %v1059, 125
    %v1460 = vpop.permute.xlu0 %1459
    %1461 = vrot.lane.b32.xlu0 %v1063, 125
    %v1462 = vpop.permute.xlu0 %1461
    %1463 = vrot.lane.b32.xlu0 %v1051, 125
    %v1464 = vpop.permute.xlu0 %1463
    %1465 = vrot.lane.b32.xlu0 %v1055, 125
    %v1466 = vpop.permute.xlu0 %1465
    %1467 = vrot.lane.b32.xlu0 %v1061, 125
    %v1468 = vpop.permute.xlu0 %1467
    %1469 = vrot.lane.b32.xlu0 %v1065, 125
    %v1470 = vpop.permute.xlu0 %1469
    %vm1471 = vcmp.lt.s32.totalorder %v1212, 125
    %v1472 = vsel %vm1471, %v1456, %v1464
    %v1473 = vsel %vm1471, %v1458, %v1466
    %v1474 = vsel %vm1471, %v1460, %v1468
    %v1475 = vsel %vm1471, %v1462, %v1470
    %v1476 = vsel %vm1471, %v1448, %v1456
    %v1477 = vsel %vm1471, %v1450, %v1458
    %v1478 = vsel %vm1471, %v1452, %v1460
    %v1479 = vsel %vm1471, %v1454, %v1462
    %v1480 = vsel %vm1471, %v1440, %v1448
    %v1481 = vsel %vm1471, %v1442, %v1450
    %v1482 = vsel %vm1471, %v1444, %v1452
    %v1483 = vsel %vm1471, %v1446, %v1454
    %v1484 = vsel %vm1471, %v1432, %v1440
    %v1485 = vsel %vm1471, %v1434, %v1442
    %v1486 = vsel %vm1471, %v1436, %v1444
    %v1487 = vsel %vm1471, %v1438, %v1446
    %v1488 = vsel %vm1471, %v1424, %v1432
    %v1489 = vsel %vm1471, %v1426, %v1434
    %v1490 = vsel %vm1471, %v1428, %v1436
    %v1491 = vsel %vm1471, %v1430, %v1438
    %v1492 = vsel %vm1471, %v1416, %v1424
    %v1493 = vsel %vm1471, %v1418, %v1426
    %v1494 = vsel %vm1471, %v1420, %v1428
    %v1495 = vsel %vm1471, %v1422, %v1430
    %v1496 = vsel %vm1471, %v1408, %v1416
    %v1497 = vsel %vm1471, %v1410, %v1418
    %v1498 = vsel %vm1471, %v1412, %v1420
    %v1499 = vsel %vm1471, %v1414, %v1422
    %v1500 = vsel %vm1471, %v1464, %v1408
    %v1501 = vsel %vm1471, %v1466, %v1410
    %v1502 = vsel %vm1471, %v1468, %v1412
    %v1503 = vsel %vm1471, %v1470, %v1414
    %v1504 = vadd.f32 %v1375, %v1496
    %v1505 = vadd.f32 %v1376, %v1492
    %v1506 = vadd.f32 %v1377, %v1488
    %v1507 = vadd.f32 %v1378, %v1484
    %v1508 = vadd.f32 %v1379, %v1480
    %v1509 = vadd.f32 %v1380, %v1476
    %v1510 = vadd.f32 %v1381, %v1472
    %v1511 = vadd.f32 %v1382, %v1500
    %v1512 = vadd.f32 %v1383, %v1497
    %v1513 = vadd.f32 %v1384, %v1493
    %v1514 = vadd.f32 %v1385, %v1489
    %v1515 = vadd.f32 %v1386, %v1485
    %v1516 = vadd.f32 %v1387, %v1481
    %v1517 = vadd.f32 %v1388, %v1477
    %v1518 = vadd.f32 %v1389, %v1473
    %v1519 = vadd.f32 %v1390, %v1501
    %v1520 = vadd.f32 %v1391, %v1498
    %v1521 = vadd.f32 %v1392, %v1494
    %v1522 = vadd.f32 %v1393, %v1490
    %v1523 = vadd.f32 %v1394, %v1486
    %v1524 = vadd.f32 %v1395, %v1482
    %v1525 = vadd.f32 %v1396, %v1478
    %v1526 = vadd.f32 %v1397, %v1474
    %v1527 = vadd.f32 %v1398, %v1502
    %v1528 = vadd.f32 %v1399, %v1499
    %v1529 = vadd.f32 %v1400, %v1495
    %v1530 = vadd.f32 %v1401, %v1491
    %v1531 = vadd.f32 %v1402, %v1487
    %v1532 = vadd.f32 %v1403, %v1483
    %v1533 = vadd.f32 %v1404, %v1479
    %v1534 = vadd.f32 %v1405, %v1475
    %v1535 = vadd.f32 %v1406, %v1503
    %1536 = vrot.lane.b32.xlu0 %v490, 124
    %v1537 = vpop.permute.xlu0 %1536
    %1538 = vrot.lane.b32.xlu0 %v494, 124
    %v1539 = vpop.permute.xlu0 %1538
    %1540 = vrot.lane.b32.xlu0 %v500, 124
    %v1541 = vpop.permute.xlu0 %1540
    %1542 = vrot.lane.b32.xlu0 %v504, 124
    %v1543 = vpop.permute.xlu0 %1542
    %1544 = vrot.lane.b32.xlu0 %v492, 124
    %v1545 = vpop.permute.xlu0 %1544
    %1546 = vrot.lane.b32.xlu0 %v496, 124
    %v1547 = vpop.permute.xlu0 %1546
    %1548 = vrot.lane.b32.xlu0 %v502, 124
    %v1549 = vpop.permute.xlu0 %1548
    %1550 = vrot.lane.b32.xlu0 %v506, 124
    %v1551 = vpop.permute.xlu0 %1550
    %1552 = vrot.lane.b32.xlu0 %v683, 124
    %v1553 = vpop.permute.xlu0 %1552
    %1554 = vrot.lane.b32.xlu0 %v687, 124
    %v1555 = vpop.permute.xlu0 %1554
    %1556 = vrot.lane.b32.xlu0 %v693, 124
    %v1557 = vpop.permute.xlu0 %1556
    %1558 = vrot.lane.b32.xlu0 %v697, 124
    %v1559 = vpop.permute.xlu0 %1558
    %1560 = vrot.lane.b32.xlu0 %v685, 124
    %v1561 = vpop.permute.xlu0 %1560
    %1562 = vrot.lane.b32.xlu0 %v689, 124
    %v1563 = vpop.permute.xlu0 %1562
    %1564 = vrot.lane.b32.xlu0 %v695, 124
    %v1565 = vpop.permute.xlu0 %1564
    %1566 = vrot.lane.b32.xlu0 %v699, 124
    %v1567 = vpop.permute.xlu0 %1566
    %1568 = vrot.lane.b32.xlu0 %v876, 124
    %v1569 = vpop.permute.xlu0 %1568
    %1570 = vrot.lane.b32.xlu0 %v880, 124
    %v1571 = vpop.permute.xlu0 %1570
    %1572 = vrot.lane.b32.xlu0 %v886, 124
    %v1573 = vpop.permute.xlu0 %1572
    %1574 = vrot.lane.b32.xlu0 %v890, 124
    %v1575 = vpop.permute.xlu0 %1574
    %1576 = vrot.lane.b32.xlu0 %v878, 124
    %v1577 = vpop.permute.xlu0 %1576
    %1578 = vrot.lane.b32.xlu0 %v882, 124
    %v1579 = vpop.permute.xlu0 %1578
    %1580 = vrot.lane.b32.xlu0 %v888, 124
    %v1581 = vpop.permute.xlu0 %1580
    %1582 = vrot.lane.b32.xlu0 %v892, 124
    %v1583 = vpop.permute.xlu0 %1582
    %1584 = vrot.lane.b32.xlu0 %v1069, 124
    %v1585 = vpop.permute.xlu0 %1584
    %1586 = vrot.lane.b32.xlu0 %v1073, 124
    %v1587 = vpop.permute.xlu0 %1586
    %1588 = vrot.lane.b32.xlu0 %v1079, 124
    %v1589 = vpop.permute.xlu0 %1588
    %1590 = vrot.lane.b32.xlu0 %v1083, 124
    %v1591 = vpop.permute.xlu0 %1590
    %1592 = vrot.lane.b32.xlu0 %v1071, 124
    %v1593 = vpop.permute.xlu0 %1592
    %1594 = vrot.lane.b32.xlu0 %v1075, 124
    %v1595 = vpop.permute.xlu0 %1594
    %1596 = vrot.lane.b32.xlu0 %v1081, 124
    %v1597 = vpop.permute.xlu0 %1596
    %1598 = vrot.lane.b32.xlu0 %v1085, 124
    %v1599 = vpop.permute.xlu0 %1598
    %vm1600 = vcmp.lt.s32.totalorder %v1212, 124
    %v1601 = vsel %vm1600, %v1585, %v1593
    %v1602 = vsel %vm1600, %v1587, %v1595
    %v1603 = vsel %vm1600, %v1589, %v1597
    %v1604 = vsel %vm1600, %v1591, %v1599
    %v1605 = vsel %vm1600, %v1577, %v1585
    %v1606 = vsel %vm1600, %v1579, %v1587
    %v1607 = vsel %vm1600, %v1581, %v1589
    %v1608 = vsel %vm1600, %v1583, %v1591
    %v1609 = vsel %vm1600, %v1569, %v1577
    %v1610 = vsel %vm1600, %v1571, %v1579
    %v1611 = vsel %vm1600, %v1573, %v1581
    %v1612 = vsel %vm1600, %v1575, %v1583
    %v1613 = vsel %vm1600, %v1561, %v1569
    %v1614 = vsel %vm1600, %v1563, %v1571
    %v1615 = vsel %vm1600, %v1565, %v1573
    %v1616 = vsel %vm1600, %v1567, %v1575
    %v1617 = vsel %vm1600, %v1553, %v1561
    %v1618 = vsel %vm1600, %v1555, %v1563
    %v1619 = vsel %vm1600, %v1557, %v1565
    %v1620 = vsel %vm1600, %v1559, %v1567
    %v1621 = vsel %vm1600, %v1545, %v1553
    %v1622 = vsel %vm1600, %v1547, %v1555
    %v1623 = vsel %vm1600, %v1549, %v1557
    %v1624 = vsel %vm1600, %v1551, %v1559
    %v1625 = vsel %vm1600, %v1537, %v1545
    %v1626 = vsel %vm1600, %v1539, %v1547
    %v1627 = vsel %vm1600, %v1541, %v1549
    %v1628 = vsel %vm1600, %v1543, %v1551
    %v1629 = vsel %vm1600, %v1593, %v1537
    %v1630 = vsel %vm1600, %v1595, %v1539
    %v1631 = vsel %vm1600, %v1597, %v1541
    %v1632 = vsel %vm1600, %v1599, %v1543
    %v1633 = vadd.f32 %v1504, %v1625
    %v1634 = vadd.f32 %v1505, %v1621
    %v1635 = vadd.f32 %v1506, %v1617
    %v1636 = vadd.f32 %v1507, %v1613
    %v1637 = vadd.f32 %v1508, %v1609
    %v1638 = vadd.f32 %v1509, %v1605
    %v1639 = vadd.f32 %v1510, %v1601
    %v1640 = vadd.f32 %v1511, %v1629
    %v1641 = vadd.f32 %v1512, %v1626
    %v1642 = vadd.f32 %v1513, %v1622
    %v1643 = vadd.f32 %v1514, %v1618
    %v1644 = vadd.f32 %v1515, %v1614
    %v1645 = vadd.f32 %v1516, %v1610
    %v1646 = vadd.f32 %v1517, %v1606
    %v1647 = vadd.f32 %v1518, %v1602
    %v1648 = vadd.f32 %v1519, %v1630
    %v1649 = vadd.f32 %v1520, %v1627
    %v1650 = vadd.f32 %v1521, %v1623
    %v1651 = vadd.f32 %v1522, %v1619
    %v1652 = vadd.f32 %v1523, %v1615
    %v1653 = vadd.f32 %v1524, %v1611
    %v1654 = vadd.f32 %v1525, %v1607
    %v1655 = vadd.f32 %v1526, %v1603
    %v1656 = vadd.f32 %v1527, %v1631
    %v1657 = vadd.f32 %v1528, %v1628
    %v1658 = vadd.f32 %v1529, %v1624
    %v1659 = vadd.f32 %v1530, %v1620
    %v1660 = vadd.f32 %v1531, %v1616
    %v1661 = vadd.f32 %v1532, %v1612
    %v1662 = vadd.f32 %v1533, %v1608
    %v1663 = vadd.f32 %v1534, %v1604
    %v1664 = vadd.f32 %v1535, %v1632
    %1665 = vrot.lane.b32.xlu0 %v510, 123
    %v1666 = vpop.permute.xlu0 %1665
    %1667 = vrot.lane.b32.xlu0 %v514, 123
    %v1668 = vpop.permute.xlu0 %1667
    %1669 = vrot.lane.b32.xlu0 %v520, 123
    %v1670 = vpop.permute.xlu0 %1669
    %1671 = vrot.lane.b32.xlu0 %v524, 123
    %v1672 = vpop.permute.xlu0 %1671
    %1673 = vrot.lane.b32.xlu0 %v512, 123
    %v1674 = vpop.permute.xlu0 %1673
    %1675 = vrot.lane.b32.xlu0 %v516, 123
    %v1676 = vpop.permute.xlu0 %1675
    %1677 = vrot.lane.b32.xlu0 %v522, 123
    %v1678 = vpop.permute.xlu0 %1677
    %1679 = vrot.lane.b32.xlu0 %v526, 123
    %v1680 = vpop.permute.xlu0 %1679
    %1681 = vrot.lane.b32.xlu0 %v703, 123
    %v1682 = vpop.permute.xlu0 %1681
    %1683 = vrot.lane.b32.xlu0 %v707, 123
    %v1684 = vpop.permute.xlu0 %1683
    %1685 = vrot.lane.b32.xlu0 %v713, 123
    %v1686 = vpop.permute.xlu0 %1685
    %1687 = vrot.lane.b32.xlu0 %v717, 123
    %v1688 = vpop.permute.xlu0 %1687
    %1689 = vrot.lane.b32.xlu0 %v705, 123
    %v1690 = vpop.permute.xlu0 %1689
    %1691 = vrot.lane.b32.xlu0 %v709, 123
    %v1692 = vpop.permute.xlu0 %1691
    %1693 = vrot.lane.b32.xlu0 %v715, 123
    %v1694 = vpop.permute.xlu0 %1693
    %1695 = vrot.lane.b32.xlu0 %v719, 123
    %v1696 = vpop.permute.xlu0 %1695
    %1697 = vrot.lane.b32.xlu0 %v896, 123
    %v1698 = vpop.permute.xlu0 %1697
    %1699 = vrot.lane.b32.xlu0 %v900, 123
    %v1700 = vpop.permute.xlu0 %1699
    %1701 = vrot.lane.b32.xlu0 %v906, 123
    %v1702 = vpop.permute.xlu0 %1701
    %1703 = vrot.lane.b32.xlu0 %v910, 123
    %v1704 = vpop.permute.xlu0 %1703
    %1705 = vrot.lane.b32.xlu0 %v898, 123
    %v1706 = vpop.permute.xlu0 %1705
    %1707 = vrot.lane.b32.xlu0 %v902, 123
    %v1708 = vpop.permute.xlu0 %1707
    %1709 = vrot.lane.b32.xlu0 %v908, 123
    %v1710 = vpop.permute.xlu0 %1709
    %1711 = vrot.lane.b32.xlu0 %v912, 123
    %v1712 = vpop.permute.xlu0 %1711
    %1713 = vrot.lane.b32.xlu0 %v1089, 123
    %v1714 = vpop.permute.xlu0 %1713
    %1715 = vrot.lane.b32.xlu0 %v1093, 123
    %v1716 = vpop.permute.xlu0 %1715
    %1717 = vrot.lane.b32.xlu0 %v1099, 123
    %v1718 = vpop.permute.xlu0 %1717
    %1719 = vrot.lane.b32.xlu0 %v1103, 123
    %v1720 = vpop.permute.xlu0 %1719
    %1721 = vrot.lane.b32.xlu0 %v1091, 123
    %v1722 = vpop.permute.xlu0 %1721
    %1723 = vrot.lane.b32.xlu0 %v1095, 123
    %v1724 = vpop.permute.xlu0 %1723
    %1725 = vrot.lane.b32.xlu0 %v1101, 123
    %v1726 = vpop.permute.xlu0 %1725
    %1727 = vrot.lane.b32.xlu0 %v1105, 123
    %v1728 = vpop.permute.xlu0 %1727
    %vm1729 = vcmp.lt.s32.totalorder %v1212, 123
    %v1730 = vsel %vm1729, %v1714, %v1722
    %v1731 = vsel %vm1729, %v1716, %v1724
    %v1732 = vsel %vm1729, %v1718, %v1726
    %v1733 = vsel %vm1729, %v1720, %v1728
    %v1734 = vsel %vm1729, %v1706, %v1714
    %v1735 = vsel %vm1729, %v1708, %v1716
    %v1736 = vsel %vm1729, %v1710, %v1718
    %v1737 = vsel %vm1729, %v1712, %v1720
    %v1738 = vsel %vm1729, %v1698, %v1706
    %v1739 = vsel %vm1729, %v1700, %v1708
    %v1740 = vsel %vm1729, %v1702, %v1710
    %v1741 = vsel %vm1729, %v1704, %v1712
    %v1742 = vsel %vm1729, %v1690, %v1698
    %v1743 = vsel %vm1729, %v1692, %v1700
    %v1744 = vsel %vm1729, %v1694, %v1702
    %v1745 = vsel %vm1729, %v1696, %v1704
    %v1746 = vsel %vm1729, %v1682, %v1690
    %v1747 = vsel %vm1729, %v1684, %v1692
    %v1748 = vsel %vm1729, %v1686, %v1694
    %v1749 = vsel %vm1729, %v1688, %v1696
    %v1750 = vsel %vm1729, %v1674, %v1682
    %v1751 = vsel %vm1729, %v1676, %v1684
    %v1752 = vsel %vm1729, %v1678, %v1686
    %v1753 = vsel %vm1729, %v1680, %v1688
    %v1754 = vsel %vm1729, %v1666, %v1674
    %v1755 = vsel %vm1729, %v1668, %v1676
    %v1756 = vsel %vm1729, %v1670, %v1678
    %v1757 = vsel %vm1729, %v1672, %v1680
    %v1758 = vsel %vm1729, %v1722, %v1666
    %v1759 = vsel %vm1729, %v1724, %v1668
    %v1760 = vsel %vm1729, %v1726, %v1670
    %v1761 = vsel %vm1729, %v1728, %v1672
    %v1762 = vadd.f32 %v1633, %v1754
    %v1763 = vadd.f32 %v1634, %v1750
    %v1764 = vadd.f32 %v1635, %v1746
    %v1765 = vadd.f32 %v1636, %v1742
    %v1766 = vadd.f32 %v1637, %v1738
    %v1767 = vadd.f32 %v1638, %v1734
    %v1768 = vadd.f32 %v1639, %v1730
    %v1769 = vadd.f32 %v1640, %v1758
    %v1770 = vadd.f32 %v1641, %v1755
    %v1771 = vadd.f32 %v1642, %v1751
    %v1772 = vadd.f32 %v1643, %v1747
    %v1773 = vadd.f32 %v1644, %v1743
    %v1774 = vadd.f32 %v1645, %v1739
    %v1775 = vadd.f32 %v1646, %v1735
    %v1776 = vadd.f32 %v1647, %v1731
    %v1777 = vadd.f32 %v1648, %v1759
    %v1778 = vadd.f32 %v1649, %v1756
    %v1779 = vadd.f32 %v1650, %v1752
    %v1780 = vadd.f32 %v1651, %v1748
    %v1781 = vadd.f32 %v1652, %v1744
    %v1782 = vadd.f32 %v1653, %v1740
    %v1783 = vadd.f32 %v1654, %v1736
    %v1784 = vadd.f32 %v1655, %v1732
    %v1785 = vadd.f32 %v1656, %v1760
    %v1786 = vadd.f32 %v1657, %v1757
    %v1787 = vadd.f32 %v1658, %v1753
    %v1788 = vadd.f32 %v1659, %v1749
    %v1789 = vadd.f32 %v1660, %v1745
    %v1790 = vadd.f32 %v1661, %v1741
    %v1791 = vadd.f32 %v1662, %v1737
    %v1792 = vadd.f32 %v1663, %v1733
    %v1793 = vadd.f32 %v1664, %v1761
    %1794 = vrot.lane.b32.xlu0 %v530, 122
    %v1795 = vpop.permute.xlu0 %1794
    %1796 = vrot.lane.b32.xlu0 %v534, 122
    %v1797 = vpop.permute.xlu0 %1796
    %1798 = vrot.lane.b32.xlu0 %v540, 122
    %v1799 = vpop.permute.xlu0 %1798
    %1800 = vrot.lane.b32.xlu0 %v544, 122
    %v1801 = vpop.permute.xlu0 %1800
    %1802 = vrot.lane.b32.xlu0 %v532, 122
    %v1803 = vpop.permute.xlu0 %1802
    %1804 = vrot.lane.b32.xlu0 %v536, 122
    %v1805 = vpop.permute.xlu0 %1804
    %1806 = vrot.lane.b32.xlu0 %v542, 122
    %v1807 = vpop.permute.xlu0 %1806
    %1808 = vrot.lane.b32.xlu0 %v546, 122
    %v1809 = vpop.permute.xlu0 %1808
    %1810 = vrot.lane.b32.xlu0 %v723, 122
    %v1811 = vpop.permute.xlu0 %1810
    %1812 = vrot.lane.b32.xlu0 %v727, 122
    %v1813 = vpop.permute.xlu0 %1812
    %1814 = vrot.lane.b32.xlu0 %v733, 122
    %v1815 = vpop.permute.xlu0 %1814
    %1816 = vrot.lane.b32.xlu0 %v737, 122
    %v1817 = vpop.permute.xlu0 %1816
    %1818 = vrot.lane.b32.xlu0 %v725, 122
    %v1819 = vpop.permute.xlu0 %1818
    %1820 = vrot.lane.b32.xlu0 %v729, 122
    %v1821 = vpop.permute.xlu0 %1820
    %1822 = vrot.lane.b32.xlu0 %v735, 122
    %v1823 = vpop.permute.xlu0 %1822
    %1824 = vrot.lane.b32.xlu0 %v739, 122
    %v1825 = vpop.permute.xlu0 %1824
    %1826 = vrot.lane.b32.xlu0 %v916, 122
    %v1827 = vpop.permute.xlu0 %1826
    %1828 = vrot.lane.b32.xlu0 %v920, 122
    %v1829 = vpop.permute.xlu0 %1828
    %1830 = vrot.lane.b32.xlu0 %v926, 122
    %v1831 = vpop.permute.xlu0 %1830
    %1832 = vrot.lane.b32.xlu0 %v930, 122
    %v1833 = vpop.permute.xlu0 %1832
    %1834 = vrot.lane.b32.xlu0 %v918, 122
    %v1835 = vpop.permute.xlu0 %1834
    %1836 = vrot.lane.b32.xlu0 %v922, 122
    %v1837 = vpop.permute.xlu0 %1836
    %1838 = vrot.lane.b32.xlu0 %v928, 122
    %v1839 = vpop.permute.xlu0 %1838
    %1840 = vrot.lane.b32.xlu0 %v932, 122
    %v1841 = vpop.permute.xlu0 %1840
    %1842 = vrot.lane.b32.xlu0 %v1109, 122
    %v1843 = vpop.permute.xlu0 %1842
    %1844 = vrot.lane.b32.xlu0 %v1113, 122
    %v1845 = vpop.permute.xlu0 %1844
    %1846 = vrot.lane.b32.xlu0 %v1119, 122
    %v1847 = vpop.permute.xlu0 %1846
    %1848 = vrot.lane.b32.xlu0 %v1123, 122
    %v1849 = vpop.permute.xlu0 %1848
    %1850 = vrot.lane.b32.xlu0 %v1111, 122
    %v1851 = vpop.permute.xlu0 %1850
    %1852 = vrot.lane.b32.xlu0 %v1115, 122
    %v1853 = vpop.permute.xlu0 %1852
    %1854 = vrot.lane.b32.xlu0 %v1121, 122
    %v1855 = vpop.permute.xlu0 %1854
    %1856 = vrot.lane.b32.xlu0 %v1125, 122
    %v1857 = vpop.permute.xlu0 %1856
    %vm1858 = vcmp.lt.s32.totalorder %v1212, 122
    %v1859 = vsel %vm1858, %v1843, %v1851
    %v1860 = vsel %vm1858, %v1845, %v1853
    %v1861 = vsel %vm1858, %v1847, %v1855
    %v1862 = vsel %vm1858, %v1849, %v1857
    %v1863 = vsel %vm1858, %v1835, %v1843
    %v1864 = vsel %vm1858, %v1837, %v1845
    %v1865 = vsel %vm1858, %v1839, %v1847
    %v1866 = vsel %vm1858, %v1841, %v1849
    %v1867 = vsel %vm1858, %v1827, %v1835
    %v1868 = vsel %vm1858, %v1829, %v1837
    %v1869 = vsel %vm1858, %v1831, %v1839
    %v1870 = vsel %vm1858, %v1833, %v1841
    %v1871 = vsel %vm1858, %v1819, %v1827
    %v1872 = vsel %vm1858, %v1821, %v1829
    %v1873 = vsel %vm1858, %v1823, %v1831
    %v1874 = vsel %vm1858, %v1825, %v1833
    %v1875 = vsel %vm1858, %v1811, %v1819
    %v1876 = vsel %vm1858, %v1813, %v1821
    %v1877 = vsel %vm1858, %v1815, %v1823
    %v1878 = vsel %vm1858, %v1817, %v1825
    %v1879 = vsel %vm1858, %v1803, %v1811
    %v1880 = vsel %vm1858, %v1805, %v1813
    %v1881 = vsel %vm1858, %v1807, %v1815
    %v1882 = vsel %vm1858, %v1809, %v1817
    %v1883 = vsel %vm1858, %v1795, %v1803
    %v1884 = vsel %vm1858, %v1797, %v1805
    %v1885 = vsel %vm1858, %v1799, %v1807
    %v1886 = vsel %vm1858, %v1801, %v1809
    %v1887 = vsel %vm1858, %v1851, %v1795
    %v1888 = vsel %vm1858, %v1853, %v1797
    %v1889 = vsel %vm1858, %v1855, %v1799
    %v1890 = vsel %vm1858, %v1857, %v1801
    %v1891 = vadd.f32 %v1762, %v1883
    %v1892 = vadd.f32 %v1763, %v1879
    %v1893 = vadd.f32 %v1764, %v1875
    %v1894 = vadd.f32 %v1765, %v1871
    %v1895 = vadd.f32 %v1766, %v1867
    %v1896 = vadd.f32 %v1767, %v1863
    %v1897 = vadd.f32 %v1768, %v1859
    %v1898 = vadd.f32 %v1769, %v1887
    %v1899 = vadd.f32 %v1770, %v1884
    %v1900 = vadd.f32 %v1771, %v1880
    %v1901 = vadd.f32 %v1772, %v1876
    %v1902 = vadd.f32 %v1773, %v1872
    %v1903 = vadd.f32 %v1774, %v1868
    %v1904 = vadd.f32 %v1775, %v1864
    %v1905 = vadd.f32 %v1776, %v1860
    %v1906 = vadd.f32 %v1777, %v1888
    %v1907 = vadd.f32 %v1778, %v1885
    %v1908 = vadd.f32 %v1779, %v1881
    %v1909 = vadd.f32 %v1780, %v1877
    %v1910 = vadd.f32 %v1781, %v1873
    %v1911 = vadd.f32 %v1782, %v1869
    %v1912 = vadd.f32 %v1783, %v1865
    %v1913 = vadd.f32 %v1784, %v1861
    %v1914 = vadd.f32 %v1785, %v1889
    %v1915 = vadd.f32 %v1786, %v1886
    %v1916 = vadd.f32 %v1787, %v1882
    %v1917 = vadd.f32 %v1788, %v1878
    %v1918 = vadd.f32 %v1789, %v1874
    %v1919 = vadd.f32 %v1790, %v1870
    %v1920 = vadd.f32 %v1791, %v1866
    %v1921 = vadd.f32 %v1792, %v1862
    %v1922 = vadd.f32 %v1793, %v1890
    %1923 = vrot.lane.b32.xlu0 %v550, 121
    %v1924 = vpop.permute.xlu0 %1923
    %1925 = vrot.lane.b32.xlu0 %v554, 121
    %v1926 = vpop.permute.xlu0 %1925
    %1927 = vrot.lane.b32.xlu0 %v560, 121
    %v1928 = vpop.permute.xlu0 %1927
    %1929 = vrot.lane.b32.xlu0 %v564, 121
    %v1930 = vpop.permute.xlu0 %1929
    %1931 = vrot.lane.b32.xlu0 %v552, 121
    %v1932 = vpop.permute.xlu0 %1931
    %1933 = vrot.lane.b32.xlu0 %v556, 121
    %v1934 = vpop.permute.xlu0 %1933
    %1935 = vrot.lane.b32.xlu0 %v562, 121
    %v1936 = vpop.permute.xlu0 %1935
    %1937 = vrot.lane.b32.xlu0 %v566, 121
    %v1938 = vpop.permute.xlu0 %1937
    %1939 = vrot.lane.b32.xlu0 %v743, 121
    %v1940 = vpop.permute.xlu0 %1939
    %1941 = vrot.lane.b32.xlu0 %v747, 121
    %v1942 = vpop.permute.xlu0 %1941
    %1943 = vrot.lane.b32.xlu0 %v753, 121
    %v1944 = vpop.permute.xlu0 %1943
    %1945 = vrot.lane.b32.xlu0 %v757, 121
    %v1946 = vpop.permute.xlu0 %1945
    %1947 = vrot.lane.b32.xlu0 %v745, 121
    %v1948 = vpop.permute.xlu0 %1947
    %1949 = vrot.lane.b32.xlu0 %v749, 121
    %v1950 = vpop.permute.xlu0 %1949
    %1951 = vrot.lane.b32.xlu0 %v755, 121
    %v1952 = vpop.permute.xlu0 %1951
    %1953 = vrot.lane.b32.xlu0 %v759, 121
    %v1954 = vpop.permute.xlu0 %1953
    %1955 = vrot.lane.b32.xlu0 %v936, 121
    %v1956 = vpop.permute.xlu0 %1955
    %1957 = vrot.lane.b32.xlu0 %v940, 121
    %v1958 = vpop.permute.xlu0 %1957
    %1959 = vrot.lane.b32.xlu0 %v946, 121
    %v1960 = vpop.permute.xlu0 %1959
    %1961 = vrot.lane.b32.xlu0 %v950, 121
    %v1962 = vpop.permute.xlu0 %1961
    %1963 = vrot.lane.b32.xlu0 %v938, 121
    %v1964 = vpop.permute.xlu0 %1963
    %1965 = vrot.lane.b32.xlu0 %v942, 121
    %v1966 = vpop.permute.xlu0 %1965
    %1967 = vrot.lane.b32.xlu0 %v948, 121
    %v1968 = vpop.permute.xlu0 %1967
    %1969 = vrot.lane.b32.xlu0 %v952, 121
    %v1970 = vpop.permute.xlu0 %1969
    %1971 = vrot.lane.b32.xlu0 %v1129, 121
    %v1972 = vpop.permute.xlu0 %1971
    %1973 = vrot.lane.b32.xlu0 %v1133, 121
    %v1974 = vpop.permute.xlu0 %1973
    %1975 = vrot.lane.b32.xlu0 %v1139, 121
    %v1976 = vpop.permute.xlu0 %1975
    %1977 = vrot.lane.b32.xlu0 %v1143, 121
    %v1978 = vpop.permute.xlu0 %1977
    %1979 = vrot.lane.b32.xlu0 %v1131, 121
    %v1980 = vpop.permute.xlu0 %1979
    %1981 = vrot.lane.b32.xlu0 %v1135, 121
    %v1982 = vpop.permute.xlu0 %1981
    %1983 = vrot.lane.b32.xlu0 %v1141, 121
    %v1984 = vpop.permute.xlu0 %1983
    %1985 = vrot.lane.b32.xlu0 %v1145, 121
    %v1986 = vpop.permute.xlu0 %1985
    %vm1987 = vcmp.lt.s32.totalorder %v1212, 121
    %v1988 = vsel %vm1987, %v1972, %v1980
    %v1989 = vsel %vm1987, %v1974, %v1982
    %v1990 = vsel %vm1987, %v1976, %v1984
    %v1991 = vsel %vm1987, %v1978, %v1986
    %v1992 = vsel %vm1987, %v1964, %v1972
    %v1993 = vsel %vm1987, %v1966, %v1974
    %v1994 = vsel %vm1987, %v1968, %v1976
    %v1995 = vsel %vm1987, %v1970, %v1978
    %v1996 = vsel %vm1987, %v1956, %v1964
    %v1997 = vsel %vm1987, %v1958, %v1966
    %v1998 = vsel %vm1987, %v1960, %v1968
    %v1999 = vsel %vm1987, %v1962, %v1970
    %v2000 = vsel %vm1987, %v1948, %v1956
    %v2001 = vsel %vm1987, %v1950, %v1958
    %v2002 = vsel %vm1987, %v1952, %v1960
    %v2003 = vsel %vm1987, %v1954, %v1962
    %v2004 = vsel %vm1987, %v1940, %v1948
    %v2005 = vsel %vm1987, %v1942, %v1950
    %v2006 = vsel %vm1987, %v1944, %v1952
    %v2007 = vsel %vm1987, %v1946, %v1954
    %v2008 = vsel %vm1987, %v1932, %v1940
    %v2009 = vsel %vm1987, %v1934, %v1942
    %v2010 = vsel %vm1987, %v1936, %v1944
    %v2011 = vsel %vm1987, %v1938, %v1946
    %v2012 = vsel %vm1987, %v1924, %v1932
    %v2013 = vsel %vm1987, %v1926, %v1934
    %v2014 = vsel %vm1987, %v1928, %v1936
    %v2015 = vsel %vm1987, %v1930, %v1938
    %v2016 = vsel %vm1987, %v1980, %v1924
    %v2017 = vsel %vm1987, %v1982, %v1926
    %v2018 = vsel %vm1987, %v1984, %v1928
    %v2019 = vsel %vm1987, %v1986, %v1930
    %v2020 = vadd.f32 %v1891, %v2012
    %v2021 = vadd.f32 %v1892, %v2008
    %v2022 = vadd.f32 %v1893, %v2004
    %v2023 = vadd.f32 %v1894, %v2000
    %v2024 = vadd.f32 %v1895, %v1996
    %v2025 = vadd.f32 %v1896, %v1992
    %v2026 = vadd.f32 %v1897, %v1988
    %v2027 = vadd.f32 %v1898, %v2016
    %v2028 = vadd.f32 %v1899, %v2013
    %v2029 = vadd.f32 %v1900, %v2009
    %v2030 = vadd.f32 %v1901, %v2005
    %v2031 = vadd.f32 %v1902, %v2001
    %v2032 = vadd.f32 %v1903, %v1997
    %v2033 = vadd.f32 %v1904, %v1993
    %v2034 = vadd.f32 %v1905, %v1989
    %v2035 = vadd.f32 %v1906, %v2017
    %v2036 = vadd.f32 %v1907, %v2014
    %v2037 = vadd.f32 %v1908, %v2010
    %v2038 = vadd.f32 %v1909, %v2006
    %v2039 = vadd.f32 %v1910, %v2002
    %v2040 = vadd.f32 %v1911, %v1998
    %v2041 = vadd.f32 %v1912, %v1994
    %v2042 = vadd.f32 %v1913, %v1990
    %v2043 = vadd.f32 %v1914, %v2018
    %v2044 = vadd.f32 %v1915, %v2015
    %v2045 = vadd.f32 %v1916, %v2011
    %v2046 = vadd.f32 %v1917, %v2007
    %v2047 = vadd.f32 %v1918, %v2003
    %v2048 = vadd.f32 %v1919, %v1999
    %v2049 = vadd.f32 %v1920, %v1995
    %v2050 = vadd.f32 %v1921, %v1991
    %v2051 = vadd.f32 %v1922, %v2019
    %v2052 = vld [vmem:[%s2] sm:$0xff]
    %v2053 = vld [vmem:[%s2 + $0x8] sm:$0xff]
    %v2054 = vld [vmem:[%s2 + $0x10] sm:$0xff]
    %v2055 = vld [vmem:[%s2 + $0x18] sm:$0xff]
    %2057 = vset.pattern.permute.xlu0 0
    %2058 = vperm.xlu0 %2057, %v2052
    %v2059 = vpop.permute.xlu0 %2058
    %2062 = vset.pattern.permute.xlu0 0
    %2063 = vperm.xlu0 %2062, %v2053
    %v2064 = vpop.permute.xlu0 %2063
    %2067 = vset.pattern.permute.xlu0 0
    %2068 = vperm.xlu0 %2067, %v2054
    %v2069 = vpop.permute.xlu0 %2068
    %2072 = vset.pattern.permute.xlu0 0
    %2073 = vperm.xlu0 %2072, %v2055
    %v2074 = vpop.permute.xlu0 %2073
    %v2076 = vadd.f32 %v2020, %v2059
    %v2077 = vadd.f32 %v2021, %v2059
    %v2078 = vadd.f32 %v2022, %v2059
    %v2079 = vadd.f32 %v2023, %v2059
    %v2080 = vadd.f32 %v2024, %v2059
    %v2081 = vadd.f32 %v2025, %v2059
    %v2082 = vadd.f32 %v2026, %v2059
    %v2083 = vadd.f32 %v2027, %v2059
    %v2084 = vadd.f32 %v2028, %v2064
    %v2085 = vadd.f32 %v2029, %v2064
    %v2086 = vadd.f32 %v2030, %v2064
    %v2087 = vadd.f32 %v2031, %v2064
    %v2088 = vadd.f32 %v2032, %v2064
    %v2089 = vadd.f32 %v2033, %v2064
    %v2090 = vadd.f32 %v2034, %v2064
    %v2091 = vadd.f32 %v2035, %v2064
    %v2092 = vadd.f32 %v2036, %v2069
    %v2093 = vadd.f32 %v2037, %v2069
    %v2094 = vadd.f32 %v2038, %v2069
    %v2095 = vadd.f32 %v2039, %v2069
    %v2096 = vadd.f32 %v2040, %v2069
    %v2097 = vadd.f32 %v2041, %v2069
    %v2098 = vadd.f32 %v2042, %v2069
    %v2099 = vadd.f32 %v2043, %v2069
    %v2100 = vadd.f32 %v2044, %v2074
    %v2101 = vadd.f32 %v2045, %v2074
    %v2102 = vadd.f32 %v2046, %v2074
    %v2103 = vadd.f32 %v2047, %v2074
    %v2104 = vadd.f32 %v2048, %v2074
    %v2105 = vadd.f32 %v2049, %v2074
    %v2106 = vadd.f32 %v2050, %v2074
    %v2107 = vadd.f32 %v2051, %v2074
    %v2108 = vtanh.pop %v2076
    %v2109 = vtanh.pop %v2077
    %v2110 = vtanh.pop %v2078
    %v2111 = vtanh.pop %v2079
    %v2112 = vtanh.pop %v2080
    %v2113 = vtanh.pop %v2081
    %v2114 = vtanh.pop %v2082
    %v2115 = vtanh.pop %v2083
    %v2116 = vtanh.pop %v2084
    %v2117 = vtanh.pop %v2085
    %v2118 = vtanh.pop %v2086
    %v2119 = vtanh.pop %v2087
    %v2120 = vtanh.pop %v2088
    %v2121 = vtanh.pop %v2089
    %v2122 = vtanh.pop %v2090
    %v2123 = vtanh.pop %v2091
    %v2124 = vtanh.pop %v2092
    %v2125 = vtanh.pop %v2093
    %v2126 = vtanh.pop %v2094
    %v2127 = vtanh.pop %v2095
    %v2128 = vtanh.pop %v2096
    %v2129 = vtanh.pop %v2097
    %v2130 = vtanh.pop %v2098
    %v2131 = vtanh.pop %v2099
    %v2132 = vtanh.pop %v2100
    %v2133 = vtanh.pop %v2101
    %v2134 = vtanh.pop %v2102
    %v2135 = vtanh.pop %v2103
    %v2136 = vtanh.pop %v2104
    %v2137 = vtanh.pop %v2105
    %v2138 = vtanh.pop %v2106
    %v2139 = vtanh.pop %v2107
    %2140 = vrot.lane.b32.xlu0 %v2108, 127
    %v2141 = vpop.permute.xlu0 %2140
    %2142 = vrot.lane.b32.xlu0 %v2116, 127
    %v2143 = vpop.permute.xlu0 %2142
    %2144 = vrot.lane.b32.xlu0 %v2124, 127
    %v2145 = vpop.permute.xlu0 %2144
    %2146 = vrot.lane.b32.xlu0 %v2132, 127
    %v2147 = vpop.permute.xlu0 %2146
    %2148 = vrot.lane.b32.xlu0 %v2109, 127
    %v2149 = vpop.permute.xlu0 %2148
    %2150 = vrot.lane.b32.xlu0 %v2117, 127
    %v2151 = vpop.permute.xlu0 %2150
    %2152 = vrot.lane.b32.xlu0 %v2125, 127
    %v2153 = vpop.permute.xlu0 %2152
    %2154 = vrot.lane.b32.xlu0 %v2133, 127
    %v2155 = vpop.permute.xlu0 %2154
    %2156 = vrot.lane.b32.xlu0 %v2110, 127
    %v2157 = vpop.permute.xlu0 %2156
    %2158 = vrot.lane.b32.xlu0 %v2118, 127
    %v2159 = vpop.permute.xlu0 %2158
    %2160 = vrot.lane.b32.xlu0 %v2126, 127
    %v2161 = vpop.permute.xlu0 %2160
    %2162 = vrot.lane.b32.xlu0 %v2134, 127
    %v2163 = vpop.permute.xlu0 %2162
    %2164 = vrot.lane.b32.xlu0 %v2111, 127
    %v2165 = vpop.permute.xlu0 %2164
    %2166 = vrot.lane.b32.xlu0 %v2119, 127
    %v2167 = vpop.permute.xlu0 %2166
    %2168 = vrot.lane.b32.xlu0 %v2127, 127
    %v2169 = vpop.permute.xlu0 %2168
    %2170 = vrot.lane.b32.xlu0 %v2135, 127
    %v2171 = vpop.permute.xlu0 %2170
    %2172 = vrot.lane.b32.xlu0 %v2112, 127
    %v2173 = vpop.permute.xlu0 %2172
    %2174 = vrot.lane.b32.xlu0 %v2120, 127
    %v2175 = vpop.permute.xlu0 %2174
    %2176 = vrot.lane.b32.xlu0 %v2128, 127
    %v2177 = vpop.permute.xlu0 %2176
    %2178 = vrot.lane.b32.xlu0 %v2136, 127
    %v2179 = vpop.permute.xlu0 %2178
    %2180 = vrot.lane.b32.xlu0 %v2113, 127
    %v2181 = vpop.permute.xlu0 %2180
    %2182 = vrot.lane.b32.xlu0 %v2121, 127
    %v2183 = vpop.permute.xlu0 %2182
    %2184 = vrot.lane.b32.xlu0 %v2129, 127
    %v2185 = vpop.permute.xlu0 %2184
    %2186 = vrot.lane.b32.xlu0 %v2137, 127
    %v2187 = vpop.permute.xlu0 %2186
    %2188 = vrot.lane.b32.xlu0 %v2114, 127
    %v2189 = vpop.permute.xlu0 %2188
    %2190 = vrot.lane.b32.xlu0 %v2122, 127
    %v2191 = vpop.permute.xlu0 %2190
    %2192 = vrot.lane.b32.xlu0 %v2130, 127
    %v2193 = vpop.permute.xlu0 %2192
    %2194 = vrot.lane.b32.xlu0 %v2138, 127
    %v2195 = vpop.permute.xlu0 %2194
    %2196 = vrot.lane.b32.xlu0 %v2115, 127
    %v2197 = vpop.permute.xlu0 %2196
    %2198 = vrot.lane.b32.xlu0 %v2123, 127
    %v2199 = vpop.permute.xlu0 %2198
    %2200 = vrot.lane.b32.xlu0 %v2131, 127
    %v2201 = vpop.permute.xlu0 %2200
    %2202 = vrot.lane.b32.xlu0 %v2139, 127
    %v2203 = vpop.permute.xlu0 %2202
    %v2204 = vsel %vm1213, %v2189, %v2197
    %v2205 = vsel %vm1213, %v2191, %v2199
    %v2206 = vsel %vm1213, %v2193, %v2201
    %v2207 = vsel %vm1213, %v2195, %v2203
    %v2208 = vsel %vm1213, %v2181, %v2189
    %v2209 = vsel %vm1213, %v2183, %v2191
    %v2210 = vsel %vm1213, %v2185, %v2193
    %v2211 = vsel %vm1213, %v2187, %v2195
    %v2212 = vsel %vm1213, %v2173, %v2181
    %v2213 = vsel %vm1213, %v2175, %v2183
    %v2214 = vsel %vm1213, %v2177, %v2185
    %v2215 = vsel %vm1213, %v2179, %v2187
    %v2216 = vsel %vm1213, %v2165, %v2173
    %v2217 = vsel %vm1213, %v2167, %v2175
    %v2218 = vsel %vm1213, %v2169, %v2177
    %v2219 = vsel %vm1213, %v2171, %v2179
    %v2220 = vsel %vm1213, %v2157, %v2165
    %v2221 = vsel %vm1213, %v2159, %v2167
    %v2222 = vsel %vm1213, %v2161, %v2169
    %v2223 = vsel %vm1213, %v2163, %v2171
    %v2224 = vsel %vm1213, %v2149, %v2157
    %v2225 = vsel %vm1213, %v2151, %v2159
    %v2226 = vsel %vm1213, %v2153, %v2161
    %v2227 = vsel %vm1213, %v2155, %v2163
    %v2228 = vsel %vm1213, %v2141, %v2149
    %v2229 = vsel %vm1213, %v2143, %v2151
    %v2230 = vsel %vm1213, %v2145, %v2153
    %v2231 = vsel %vm1213, %v2147, %v2155
    %v2232 = vsel %vm1213, %v2197, %v2141
    %v2233 = vsel %vm1213, %v2199, %v2143
    %v2234 = vsel %vm1213, %v2201, %v2145
    %v2235 = vsel %vm1213, %v2203, %v2147
    %v2236 = vmax.f32 %v2108, %v2228
    %v2237 = vmax.f32 %v2109, %v2224
    %v2238 = vmax.f32 %v2110, %v2220
    %v2239 = vmax.f32 %v2111, %v2216
    %v2240 = vmax.f32 %v2112, %v2212
    %v2241 = vmax.f32 %v2113, %v2208
    %v2242 = vmax.f32 %v2114, %v2204
    %v2243 = vmax.f32 %v2115, %v2232
    %v2244 = vmax.f32 %v2116, %v2229
    %v2245 = vmax.f32 %v2117, %v2225
    %v2246 = vmax.f32 %v2118, %v2221
    %v2247 = vmax.f32 %v2119, %v2217
    %v2248 = vmax.f32 %v2120, %v2213
    %v2249 = vmax.f32 %v2121, %v2209
    %v2250 = vmax.f32 %v2122, %v2205
    %v2251 = vmax.f32 %v2123, %v2233
    %v2252 = vmax.f32 %v2124, %v2230
    %v2253 = vmax.f32 %v2125, %v2226
    %v2254 = vmax.f32 %v2126, %v2222
    %v2255 = vmax.f32 %v2127, %v2218
    %v2256 = vmax.f32 %v2128, %v2214
    %v2257 = vmax.f32 %v2129, %v2210
    %v2258 = vmax.f32 %v2130, %v2206
    %v2259 = vmax.f32 %v2131, %v2234
    %v2260 = vmax.f32 %v2132, %v2231
    %v2261 = vmax.f32 %v2133, %v2227
    %v2262 = vmax.f32 %v2134, %v2223
    %v2263 = vmax.f32 %v2135, %v2219
    %v2264 = vmax.f32 %v2136, %v2215
    %v2265 = vmax.f32 %v2137, %v2211
    %v2266 = vmax.f32 %v2138, %v2207
    %v2267 = vmax.f32 %v2139, %v2235
    %2268 = vrot.lane.b32.xlu0 %v2236, 126
    %v2269 = vpop.permute.xlu0 %2268
    %2270 = vrot.lane.b32.xlu0 %v2244, 126
    %v2271 = vpop.permute.xlu0 %2270
    %2272 = vrot.lane.b32.xlu0 %v2252, 126
    %v2273 = vpop.permute.xlu0 %2272
    %2274 = vrot.lane.b32.xlu0 %v2260, 126
    %v2275 = vpop.permute.xlu0 %2274
    %2276 = vrot.lane.b32.xlu0 %v2237, 126
    %v2277 = vpop.permute.xlu0 %2276
    %2278 = vrot.lane.b32.xlu0 %v2245, 126
    %v2279 = vpop.permute.xlu0 %2278
    %2280 = vrot.lane.b32.xlu0 %v2253, 126
    %v2281 = vpop.permute.xlu0 %2280
    %2282 = vrot.lane.b32.xlu0 %v2261, 126
    %v2283 = vpop.permute.xlu0 %2282
    %2284 = vrot.lane.b32.xlu0 %v2238, 126
    %v2285 = vpop.permute.xlu0 %2284
    %2286 = vrot.lane.b32.xlu0 %v2246, 126
    %v2287 = vpop.permute.xlu0 %2286
    %2288 = vrot.lane.b32.xlu0 %v2254, 126
    %v2289 = vpop.permute.xlu0 %2288
    %2290 = vrot.lane.b32.xlu0 %v2262, 126
    %v2291 = vpop.permute.xlu0 %2290
    %2292 = vrot.lane.b32.xlu0 %v2239, 126
    %v2293 = vpop.permute.xlu0 %2292
    %2294 = vrot.lane.b32.xlu0 %v2247, 126
    %v2295 = vpop.permute.xlu0 %2294
    %2296 = vrot.lane.b32.xlu0 %v2255, 126
    %v2297 = vpop.permute.xlu0 %2296
    %2298 = vrot.lane.b32.xlu0 %v2263, 126
    %v2299 = vpop.permute.xlu0 %2298
    %2300 = vrot.lane.b32.xlu0 %v2240, 126
    %v2301 = vpop.permute.xlu0 %2300
    %2302 = vrot.lane.b32.xlu0 %v2248, 126
    %v2303 = vpop.permute.xlu0 %2302
    %2304 = vrot.lane.b32.xlu0 %v2256, 126
    %v2305 = vpop.permute.xlu0 %2304
    %2306 = vrot.lane.b32.xlu0 %v2264, 126
    %v2307 = vpop.permute.xlu0 %2306
    %2308 = vrot.lane.b32.xlu0 %v2241, 126
    %v2309 = vpop.permute.xlu0 %2308
    %2310 = vrot.lane.b32.xlu0 %v2249, 126
    %v2311 = vpop.permute.xlu0 %2310
    %2312 = vrot.lane.b32.xlu0 %v2257, 126
    %v2313 = vpop.permute.xlu0 %2312
    %2314 = vrot.lane.b32.xlu0 %v2265, 126
    %v2315 = vpop.permute.xlu0 %2314
    %2316 = vrot.lane.b32.xlu0 %v2242, 126
    %v2317 = vpop.permute.xlu0 %2316
    %2318 = vrot.lane.b32.xlu0 %v2250, 126
    %v2319 = vpop.permute.xlu0 %2318
    %2320 = vrot.lane.b32.xlu0 %v2258, 126
    %v2321 = vpop.permute.xlu0 %2320
    %2322 = vrot.lane.b32.xlu0 %v2266, 126
    %v2323 = vpop.permute.xlu0 %2322
    %2324 = vrot.lane.b32.xlu0 %v2243, 126
    %v2325 = vpop.permute.xlu0 %2324
    %2326 = vrot.lane.b32.xlu0 %v2251, 126
    %v2327 = vpop.permute.xlu0 %2326
    %2328 = vrot.lane.b32.xlu0 %v2259, 126
    %v2329 = vpop.permute.xlu0 %2328
    %2330 = vrot.lane.b32.xlu0 %v2267, 126
    %v2331 = vpop.permute.xlu0 %2330
    %v2332 = vsel %vm1342, %v2317, %v2325
    %v2333 = vsel %vm1342, %v2319, %v2327
    %v2334 = vsel %vm1342, %v2321, %v2329
    %v2335 = vsel %vm1342, %v2323, %v2331
    %v2336 = vsel %vm1342, %v2309, %v2317
    %v2337 = vsel %vm1342, %v2311, %v2319
    %v2338 = vsel %vm1342, %v2313, %v2321
    %v2339 = vsel %vm1342, %v2315, %v2323
    %v2340 = vsel %vm1342, %v2301, %v2309
    %v2341 = vsel %vm1342, %v2303, %v2311
    %v2342 = vsel %vm1342, %v2305, %v2313
    %v2343 = vsel %vm1342, %v2307, %v2315
    %v2344 = vsel %vm1342, %v2293, %v2301
    %v2345 = vsel %vm1342, %v2295, %v2303
    %v2346 = vsel %vm1342, %v2297, %v2305
    %v2347 = vsel %vm1342, %v2299, %v2307
    %v2348 = vsel %vm1342, %v2285, %v2293
    %v2349 = vsel %vm1342, %v2287, %v2295
    %v2350 = vsel %vm1342, %v2289, %v2297
    %v2351 = vsel %vm1342, %v2291, %v2299
    %v2352 = vsel %vm1342, %v2277, %v2285
    %v2353 = vsel %vm1342, %v2279, %v2287
    %v2354 = vsel %vm1342, %v2281, %v2289
    %v2355 = vsel %vm1342, %v2283, %v2291
    %v2356 = vsel %vm1342, %v2269, %v2277
    %v2357 = vsel %vm1342, %v2271, %v2279
    %v2358 = vsel %vm1342, %v2273, %v2281
    %v2359 = vsel %vm1342, %v2275, %v2283
    %v2360 = vsel %vm1342, %v2325, %v2269
    %v2361 = vsel %vm1342, %v2327, %v2271
    %v2362 = vsel %vm1342, %v2329, %v2273
    %v2363 = vsel %vm1342, %v2331, %v2275
    %v2364 = vmax.f32 %v2236, %v2356
    %v2365 = vmax.f32 %v2237, %v2352
    %v2366 = vmax.f32 %v2238, %v2348
    %v2367 = vmax.f32 %v2239, %v2344
    %v2368 = vmax.f32 %v2240, %v2340
    %v2369 = vmax.f32 %v2241, %v2336
    %v2370 = vmax.f32 %v2242, %v2332
    %v2371 = vmax.f32 %v2243, %v2360
    %v2372 = vmax.f32 %v2244, %v2357
    %v2373 = vmax.f32 %v2245, %v2353
    %v2374 = vmax.f32 %v2246, %v2349
    %v2375 = vmax.f32 %v2247, %v2345
    %v2376 = vmax.f32 %v2248, %v2341
    %v2377 = vmax.f32 %v2249, %v2337
    %v2378 = vmax.f32 %v2250, %v2333
    %v2379 = vmax.f32 %v2251, %v2361
    %v2380 = vmax.f32 %v2252, %v2358
    %v2381 = vmax.f32 %v2253, %v2354
    %v2382 = vmax.f32 %v2254, %v2350
    %v2383 = vmax.f32 %v2255, %v2346
    %v2384 = vmax.f32 %v2256, %v2342
    %v2385 = vmax.f32 %v2257, %v2338
    %v2386 = vmax.f32 %v2258, %v2334
    %v2387 = vmax.f32 %v2259, %v2362
    %v2388 = vmax.f32 %v2260, %v2359
    %v2389 = vmax.f32 %v2261, %v2355
    %v2390 = vmax.f32 %v2262, %v2351
    %v2391 = vmax.f32 %v2263, %v2347
    %v2392 = vmax.f32 %v2264, %v2343
    %v2393 = vmax.f32 %v2265, %v2339
    %v2394 = vmax.f32 %v2266, %v2335
    %v2395 = vmax.f32 %v2267, %v2363
    %2396 = vrot.lane.b32.xlu0 %v2364, 124
    %v2397 = vpop.permute.xlu0 %2396
    %2398 = vrot.lane.b32.xlu0 %v2372, 124
    %v2399 = vpop.permute.xlu0 %2398
    %2400 = vrot.lane.b32.xlu0 %v2380, 124
    %v2401 = vpop.permute.xlu0 %2400
    %2402 = vrot.lane.b32.xlu0 %v2388, 124
    %v2403 = vpop.permute.xlu0 %2402
    %2404 = vrot.lane.b32.xlu0 %v2365, 124
    %v2405 = vpop.permute.xlu0 %2404
    %2406 = vrot.lane.b32.xlu0 %v2373, 124
    %v2407 = vpop.permute.xlu0 %2406
    %2408 = vrot.lane.b32.xlu0 %v2381, 124
    %v2409 = vpop.permute.xlu0 %2408
    %2410 = vrot.lane.b32.xlu0 %v2389, 124
    %v2411 = vpop.permute.xlu0 %2410
    %2412 = vrot.lane.b32.xlu0 %v2366, 124
    %v2413 = vpop.permute.xlu0 %2412
    %2414 = vrot.lane.b32.xlu0 %v2374, 124
    %v2415 = vpop.permute.xlu0 %2414
    %2416 = vrot.lane.b32.xlu0 %v2382, 124
    %v2417 = vpop.permute.xlu0 %2416
    %2418 = vrot.lane.b32.xlu0 %v2390, 124
    %v2419 = vpop.permute.xlu0 %2418
    %2420 = vrot.lane.b32.xlu0 %v2367, 124
    %v2421 = vpop.permute.xlu0 %2420
    %2422 = vrot.lane.b32.xlu0 %v2375, 124
    %v2423 = vpop.permute.xlu0 %2422
    %2424 = vrot.lane.b32.xlu0 %v2383, 124
    %v2425 = vpop.permute.xlu0 %2424
    %2426 = vrot.lane.b32.xlu0 %v2391, 124
    %v2427 = vpop.permute.xlu0 %2426
    %2428 = vrot.lane.b32.xlu0 %v2368, 124
    %v2429 = vpop.permute.xlu0 %2428
    %2430 = vrot.lane.b32.xlu0 %v2376, 124
    %v2431 = vpop.permute.xlu0 %2430
    %2432 = vrot.lane.b32.xlu0 %v2384, 124
    %v2433 = vpop.permute.xlu0 %2432
    %2434 = vrot.lane.b32.xlu0 %v2392, 124
    %v2435 = vpop.permute.xlu0 %2434
    %2436 = vrot.lane.b32.xlu0 %v2369, 124
    %v2437 = vpop.permute.xlu0 %2436
    %2438 = vrot.lane.b32.xlu0 %v2377, 124
    %v2439 = vpop.permute.xlu0 %2438
    %2440 = vrot.lane.b32.xlu0 %v2385, 124
    %v2441 = vpop.permute.xlu0 %2440
    %2442 = vrot.lane.b32.xlu0 %v2393, 124
    %v2443 = vpop.permute.xlu0 %2442
    %2444 = vrot.lane.b32.xlu0 %v2370, 124
    %v2445 = vpop.permute.xlu0 %2444
    %2446 = vrot.lane.b32.xlu0 %v2378, 124
    %v2447 = vpop.permute.xlu0 %2446
    %2448 = vrot.lane.b32.xlu0 %v2386, 124
    %v2449 = vpop.permute.xlu0 %2448
    %2450 = vrot.lane.b32.xlu0 %v2394, 124
    %v2451 = vpop.permute.xlu0 %2450
    %2452 = vrot.lane.b32.xlu0 %v2371, 124
    %v2453 = vpop.permute.xlu0 %2452
    %2454 = vrot.lane.b32.xlu0 %v2379, 124
    %v2455 = vpop.permute.xlu0 %2454
    %2456 = vrot.lane.b32.xlu0 %v2387, 124
    %v2457 = vpop.permute.xlu0 %2456
    %2458 = vrot.lane.b32.xlu0 %v2395, 124
    %v2459 = vpop.permute.xlu0 %2458
    %v2460 = vsel %vm1600, %v2445, %v2453
    %v2461 = vsel %vm1600, %v2447, %v2455
    %v2462 = vsel %vm1600, %v2449, %v2457
    %v2463 = vsel %vm1600, %v2451, %v2459
    %v2464 = vsel %vm1600, %v2437, %v2445
    %v2465 = vsel %vm1600, %v2439, %v2447
    %v2466 = vsel %vm1600, %v2441, %v2449
    %v2467 = vsel %vm1600, %v2443, %v2451
    %v2468 = vsel %vm1600, %v2429, %v2437
    %v2469 = vsel %vm1600, %v2431, %v2439
    %v2470 = vsel %vm1600, %v2433, %v2441
    %v2471 = vsel %vm1600, %v2435, %v2443
    %v2472 = vsel %vm1600, %v2421, %v2429
    %v2473 = vsel %vm1600, %v2423, %v2431
    %v2474 = vsel %vm1600, %v2425, %v2433
    %v2475 = vsel %vm1600, %v2427, %v2435
    %v2476 = vsel %vm1600, %v2413, %v2421
    %v2477 = vsel %vm1600, %v2415, %v2423
    %v2478 = vsel %vm1600, %v2417, %v2425
    %v2479 = vsel %vm1600, %v2419, %v2427
    %v2480 = vsel %vm1600, %v2405, %v2413
    %v2481 = vsel %vm1600, %v2407, %v2415
    %v2482 = vsel %vm1600, %v2409, %v2417
    %v2483 = vsel %vm1600, %v2411, %v2419
    %v2484 = vsel %vm1600, %v2397, %v2405
    %v2485 = vsel %vm1600, %v2399, %v2407
    %v2486 = vsel %vm1600, %v2401, %v2409
    %v2487 = vsel %vm1600, %v2403, %v2411
    %v2488 = vsel %vm1600, %v2453, %v2397
    %v2489 = vsel %vm1600, %v2455, %v2399
    %v2490 = vsel %vm1600, %v2457, %v2401
    %v2491 = vsel %vm1600, %v2459, %v2403
    %v2492 = vmax.f32 %v2364, %v2484
    %v2493 = vmax.f32 %v2365, %v2480
    %v2494 = vmax.f32 %v2366, %v2476
    %v2495 = vmax.f32 %v2367, %v2472
    %v2496 = vmax.f32 %v2368, %v2468
    %v2497 = vmax.f32 %v2369, %v2464
    %v2498 = vmax.f32 %v2370, %v2460
    %v2499 = vmax.f32 %v2371, %v2488
    %v2500 = vmax.f32 %v2372, %v2485
    %v2501 = vmax.f32 %v2373, %v2481
    %v2502 = vmax.f32 %v2374, %v2477
    %v2503 = vmax.f32 %v2375, %v2473
    %v2504 = vmax.f32 %v2376, %v2469
    %v2505 = vmax.f32 %v2377, %v2465
    %v2506 = vmax.f32 %v2378, %v2461
    %v2507 = vmax.f32 %v2379, %v2489
    %v2508 = vmax.f32 %v2380, %v2486
    %v2509 = vmax.f32 %v2381, %v2482
    %v2510 = vmax.f32 %v2382, %v2478
    %v2511 = vmax.f32 %v2383, %v2474
    %v2512 = vmax.f32 %v2384, %v2470
    %v2513 = vmax.f32 %v2385, %v2466
    %v2514 = vmax.f32 %v2386, %v2462
    %v2515 = vmax.f32 %v2387, %v2490
    %v2516 = vmax.f32 %v2388, %v2487
    %v2517 = vmax.f32 %v2389, %v2483
    %v2518 = vmax.f32 %v2390, %v2479
    %v2519 = vmax.f32 %v2391, %v2475
    %v2520 = vmax.f32 %v2392, %v2471
    %v2521 = vmax.f32 %v2393, %v2467
    %v2522 = vmax.f32 %v2394, %v2463
    %v2523 = vmax.f32 %v2395, %v2491
    %vm2524 = vcmp.lt.s32.totalorder %v1212, 0
    %v2525 = vsub.s32 0, %v1212
    %v2526 = vsel %vm2524, %v2525, %v1212
    %v2527 = vshrl.u32 %v2526, 3
    %v2528 = vand.u32 %v2526, 7
    %v2529 = vsub.s32 0, %v2528
    %v2530 = vsel %vm2524, %v2529, %v2528
    %vm2531 = vcmp.ne.s32.totalorder %v2530, 0
    %vm2532 = vcmp.lt.s32.totalorder %v2530, 0
    %vm2533 = vmand %vm2532, %vm2531
    %v2534 = vadd.s32 %v2530, 8
    %v2535 = vsel %vm2533, %v2534, %v2530
    %vm2536 = vcmp.eq.s32.totalorder %v2535, 0
    %vm2537 = vcmp.lt.s32.totalorder %v1212, 120
    %vm2538 = vmand %vm2536, %vm2537
    %v2539 = vsel %vm2538, %v2492, 0.0
    %v2540 = vsel %vm2538, %v2500, 0.0
    %v2541 = vsel %vm2538, %v2508, 0.0
    %v2542 = vsel %vm2538, %v2516, 0.0
    %2543 = vadd.xlane.f32.xlu0 %v2539
    %v2544 = vpop.xlane.xlu0 %2543
    %2545 = vadd.xlane.f32.xlu0 %v2540
    %v2546 = vpop.xlane.xlu0 %2545
    %2547 = vadd.xlane.f32.xlu0 %v2541
    %v2548 = vpop.xlane.xlu0 %2547
    %2549 = vadd.xlane.f32.xlu0 %v2542
    %v2550 = vpop.xlane.xlu0 %2549
    %v2551 = vsel %vm2538, %v2493, 0.0
    %v2552 = vsel %vm2538, %v2501, 0.0
    %v2553 = vsel %vm2538, %v2509, 0.0
    %v2554 = vsel %vm2538, %v2517, 0.0
    %2555 = vadd.xlane.f32.xlu0 %v2551
    %v2556 = vpop.xlane.xlu0 %2555
    %2557 = vadd.xlane.f32.xlu0 %v2552
    %v2558 = vpop.xlane.xlu0 %2557
    %2559 = vadd.xlane.f32.xlu0 %v2553
    %v2560 = vpop.xlane.xlu0 %2559
    %2561 = vadd.xlane.f32.xlu0 %v2554
    %v2562 = vpop.xlane.xlu0 %2561
    %v2563 = vsel %vm2538, %v2494, 0.0
    %v2564 = vsel %vm2538, %v2502, 0.0
    %v2565 = vsel %vm2538, %v2510, 0.0
    %v2566 = vsel %vm2538, %v2518, 0.0
    %2567 = vadd.xlane.f32.xlu0 %v2563
    %v2568 = vpop.xlane.xlu0 %2567
    %2569 = vadd.xlane.f32.xlu0 %v2564
    %v2570 = vpop.xlane.xlu0 %2569
    %2571 = vadd.xlane.f32.xlu0 %v2565
    %v2572 = vpop.xlane.xlu0 %2571
    %2573 = vadd.xlane.f32.xlu0 %v2566
    %v2574 = vpop.xlane.xlu0 %2573
    %v2575 = vsel %vm2538, %v2495, 0.0
    %v2576 = vsel %vm2538, %v2503, 0.0
    %v2577 = vsel %vm2538, %v2511, 0.0
    %v2578 = vsel %vm2538, %v2519, 0.0
    %2579 = vadd.xlane.f32.xlu0 %v2575
    %v2580 = vpop.xlane.xlu0 %2579
    %2581 = vadd.xlane.f32.xlu0 %v2576
    %v2582 = vpop.xlane.xlu0 %2581
    %2583 = vadd.xlane.f32.xlu0 %v2577
    %v2584 = vpop.xlane.xlu0 %2583
    %2585 = vadd.xlane.f32.xlu0 %v2578
    %v2586 = vpop.xlane.xlu0 %2585
    %v2587 = vsel %vm2538, %v2496, 0.0
    %v2588 = vsel %vm2538, %v2504, 0.0
    %v2589 = vsel %vm2538, %v2512, 0.0
    %v2590 = vsel %vm2538, %v2520, 0.0
    %2591 = vadd.xlane.f32.xlu0 %v2587
    %v2592 = vpop.xlane.xlu0 %2591
    %2593 = vadd.xlane.f32.xlu0 %v2588
    %v2594 = vpop.xlane.xlu0 %2593
    %2595 = vadd.xlane.f32.xlu0 %v2589
    %v2596 = vpop.xlane.xlu0 %2595
    %2597 = vadd.xlane.f32.xlu0 %v2590
    %v2598 = vpop.xlane.xlu0 %2597
    %v2599 = vsel %vm2538, %v2497, 0.0
    %v2600 = vsel %vm2538, %v2505, 0.0
    %v2601 = vsel %vm2538, %v2513, 0.0
    %v2602 = vsel %vm2538, %v2521, 0.0
    %2603 = vadd.xlane.f32.xlu0 %v2599
    %v2604 = vpop.xlane.xlu0 %2603
    %2605 = vadd.xlane.f32.xlu0 %v2600
    %v2606 = vpop.xlane.xlu0 %2605
    %2607 = vadd.xlane.f32.xlu0 %v2601
    %v2608 = vpop.xlane.xlu0 %2607
    %2609 = vadd.xlane.f32.xlu0 %v2602
    %v2610 = vpop.xlane.xlu0 %2609
    %v2611 = vsel %vm2538, %v2498, 0.0
    %v2612 = vsel %vm2538, %v2506, 0.0
    %v2613 = vsel %vm2538, %v2514, 0.0
    %v2614 = vsel %vm2538, %v2522, 0.0
    %2615 = vadd.xlane.f32.xlu0 %v2611
    %v2616 = vpop.xlane.xlu0 %2615
    %2617 = vadd.xlane.f32.xlu0 %v2612
    %v2618 = vpop.xlane.xlu0 %2617
    %2619 = vadd.xlane.f32.xlu0 %v2613
    %v2620 = vpop.xlane.xlu0 %2619
    %2621 = vadd.xlane.f32.xlu0 %v2614
    %v2622 = vpop.xlane.xlu0 %2621
    %v2623 = vsel %vm2538, %v2499, 0.0
    %v2624 = vsel %vm2538, %v2507, 0.0
    %v2625 = vsel %vm2538, %v2515, 0.0
    %v2626 = vsel %vm2538, %v2523, 0.0
    %2627 = vadd.xlane.f32.xlu0 %v2623
    %v2628 = vpop.xlane.xlu0 %2627
    %2629 = vadd.xlane.f32.xlu0 %v2624
    %v2630 = vpop.xlane.xlu0 %2629
    %2631 = vadd.xlane.f32.xlu0 %v2625
    %v2632 = vpop.xlane.xlu0 %2631
    %2633 = vadd.xlane.f32.xlu0 %v2626
    %v2634 = vpop.xlane.xlu0 %2633
    %vm2635 = vcmask 7168
    %v2636 = vsel %vm2635, %v2544, %v2556
    %v2637 = vsel %vm2635, %v2546, %v2558
    %v2638 = vsel %vm2635, %v2548, %v2560
    %v2639 = vsel %vm2635, %v2550, %v2562
    %vm2640 = vcmask 15360
    %v2641 = vsel %vm2640, %v2636, %v2568
    %v2642 = vsel %vm2640, %v2637, %v2570
    %v2643 = vsel %vm2640, %v2638, %v2572
    %v2644 = vsel %vm2640, %v2639, %v2574
    %vm2645 = vcmask 23552
    %v2646 = vsel %vm2645, %v2641, %v2580
    %v2647 = vsel %vm2645, %v2642, %v2582
    %v2648 = vsel %vm2645, %v2643, %v2584
    %v2649 = vsel %vm2645, %v2644, %v2586
    %vm2650 = vcmask 31744
    %v2651 = vsel %vm2650, %v2646, %v2592
    %v2652 = vsel %vm2650, %v2647, %v2594
    %v2653 = vsel %vm2650, %v2648, %v2596
    %v2654 = vsel %vm2650, %v2649, %v2598
    %vm2655 = vcmask 39936
    %v2656 = vsel %vm2655, %v2651, %v2604
    %v2657 = vsel %vm2655, %v2652, %v2606
    %v2658 = vsel %vm2655, %v2653, %v2608
    %v2659 = vsel %vm2655, %v2654, %v2610
    %vm2660 = vcmask 48128
    %v2661 = vsel %vm2660, %v2656, %v2616
    %v2662 = vsel %vm2660, %v2657, %v2618
    %v2663 = vsel %vm2660, %v2658, %v2620
    %v2664 = vsel %vm2660, %v2659, %v2622
    %vm2665 = vcmask 56320
    %v2666 = vsel %vm2665, %v2661, %v2628
    %v2667 = vsel %vm2665, %v2662, %v2630
    %v2668 = vsel %vm2665, %v2663, %v2632
    %v2669 = vsel %vm2665, %v2664, %v2634
    %v2670 = vld [vmem:[%s3] sm:$0xff]
    %v2671 = vld [vmem:[%s3 + $0x8] sm:$0xff]
    %v2672 = vld [vmem:[%s3 + $0x10] sm:$0xff]
    %v2673 = vld [vmem:[%s3 + $0x18] sm:$0xff]
    %v2674 = vld [vmem:[%s4] sm:$0x1]
    %v2676 = vlaneseq
    %v2677 = vshrl.u32 %v2676, 7
    %v2678 = vsub.s32 0, %v2677
    %v2679 = vrot.slane %v2674, %v2678
    %2681 = vxpose.xlu0.b32.start [1/16] %v2666, 128
    %2682 = vxpose.xlu0.b32.cont [2/16] %v2667, 128
    %2683 = vxpose.xlu0.b32.cont [3/16] %v2668, 128
    %2684 = vxpose.xlu0.b32.cont [4/16] %v2669, 128
    %2685 = vxpose.xlu0.b32.cont [5/16] 0.0, 128
    %2686 = vxpose.xlu0.b32.cont [6/16] 0.0, 128
    %2687 = vxpose.xlu0.b32.cont [7/16] 0.0, 128
    %2688 = vxpose.xlu0.b32.cont [8/16] 0.0, 128
    %2689 = vxpose.xlu0.b32.cont [9/16] 0.0, 128
    %2690 = vxpose.xlu0.b32.cont [10/16] 0.0, 128
    %2691 = vxpose.xlu0.b32.cont [11/16] 0.0, 128
    %2692 = vxpose.xlu0.b32.cont [12/16] 0.0, 128
    %2693 = vxpose.xlu0.b32.cont [13/16] 0.0, 128
    %2694 = vxpose.xlu0.b32.cont [14/16] 0.0, 128
    %2695 = vxpose.xlu0.b32.cont [15/16] 0.0, 128
    %2696 = vxpose.xlu0.b32.end [16/16] 0.0, 128
    %v2697 = vpop.trf.xlu0
    %v2698 = vpop.trf.xlu0
    %v2699 = vpop.trf.xlu0
    %v2700 = vpop.trf.xlu0
    %v2701 = vpop.trf.xlu0
    %v2702 = vpop.trf.xlu0
    %v2703 = vpop.trf.xlu0
    %v2704 = vpop.trf.xlu0
    %v2705 = vpop.trf.xlu0
    %v2706 = vpop.trf.xlu0
    %v2707 = vpop.trf.xlu0
    %v2708 = vpop.trf.xlu0
    %v2709 = vpop.trf.xlu0
    %v2710 = vpop.trf.xlu0
    %v2711 = vpop.trf.xlu0
    %v2712 = vpop.trf.xlu0
    %vm2713 = vcmask 261120
    %v2715 = vsel %vm2713, %v2697, 0
    %2717 = vmatprep.subr.mxu0 0.0
    %2718 = vmatpush1.msra.mxu0 %v2670
    %2719 = vmatprep.subr.mxu0 0.0
    %2720 = vmatpush1.msra.mxu0 %v2671
    %2721 = vmatprep.subr.mxu0 0.0
    %2722 = vmatpush1.msra.mxu0 %v2672
    %2723 = vmatprep.subr.mxu0 0.0
    %2724 = vmatpush1.msra.mxu0 %v2673
    %2725 = vmatprep.subr.mxu0 0.0
    %2726 = vmatpush1.msra.mxu0 0.0
    %2727 = vmatprep.subr.mxu0 0.0
    %2728 = vmatpush1.msra.mxu0 0.0
    %2729 = vmatprep.subr.mxu0 0.0
    %2730 = vmatpush1.msra.mxu0 0.0
    %2731 = vmatprep.subr.mxu0 0.0
    %2732 = vmatpush1.msra.mxu0 0.0
    %2733 = vmatprep.subr.mxu0 0.0
    %2734 = vmatpush1.msra.mxu0 0.0
    %2735 = vmatprep.subr.mxu0 0.0
    %2736 = vmatpush1.msra.mxu0 0.0
    %2737 = vmatprep.subr.mxu0 0.0
    %2738 = vmatpush1.msra.mxu0 0.0
    %2739 = vmatprep.subr.mxu0 0.0
    %2740 = vmatpush1.msra.mxu0 0.0
    %2741 = vmatprep.subr.mxu0 0.0
    %2742 = vmatpush1.msra.mxu0 0.0
    %2743 = vmatprep.subr.mxu0 0.0
    %2744 = vmatpush1.msra.mxu0 0.0
    %2745 = vmatprep.subr.mxu0 0.0
    %2746 = vmatpush1.msra.mxu0 0.0
    %2747 = vmatprep.subr.mxu0 0.0
    %2748 = vmatpush1.msra.mxu0 0.0
    %2749 = vmatprep.subr.mxu0 0.0
    %2750 = vmatpush1.msra.mxu0 0.0
    %2751 = vmatprep.subr.mxu0 0.0
    %2752 = vmatpush1.msra.mxu0 0.0
    %2753 = vmatprep.subr.mxu0 0.0
    %2754 = vmatpush1.msra.mxu0 0.0
    %2755 = vmatprep.subr.mxu0 0.0
    %2756 = vmatpush1.msra.mxu0 0.0
    %2757 = vmatprep.subr.mxu0 0.0
    %2758 = vmatpush1.msra.mxu0 0.0
    %2759 = vmatprep.subr.mxu0 0.0
    %2760 = vmatpush1.msra.mxu0 0.0
    %2761 = vmatprep.subr.mxu0 0.0
    %2762 = vmatpush1.msra.mxu0 0.0
    %2763 = vmatprep.subr.mxu0 0.0
    %2764 = vmatpush1.msra.mxu0 0.0
    %2765 = vmatprep.subr.mxu0 0.0
    %2766 = vmatpush1.msra.mxu0 0.0
    %2767 = vmatprep.subr.mxu0 0.0
    %2768 = vmatpush1.msra.mxu0 0.0
    %2769 = vmatprep.subr.mxu0 0.0
    %2770 = vmatpush1.msra.mxu0 0.0
    %2771 = vmatprep.subr.mxu0 0.0
    %2772 = vmatpush1.msra.mxu0 0.0
    %2773 = vmatprep.subr.mxu0 0.0
    %2774 = vmatpush1.msra.mxu0 0.0
    %2775 = vmatprep.subr.mxu0 0.0
    %2776 = vmatpush1.msra.mxu0 0.0
    %2777 = vmatprep.subr.mxu0 0.0
    %2778 = vmatpush1.msra.mxu0 0.0
    %2779 = vmatprep.subr.mxu0 0.0
    %2780 = vmatpush1.msra.mxu0 0.0
    %2781 = vmatprep.mubr.f32.mxu0 0.0
    %2782 = vmatmul.mubr.f32.gmra.mrb[0].mxu0 %v2715
    %v2783 = vpop.f32.mrb[0].mxu0
    %v2784 = vadd.f32 %v2679, %v2783
    %v2785 = vpop.f32.mrb[0].mxu0
    %2786 = vdwg.mxu0
    %vm2787 = vcmask 80896
    %v2788 = vsel %vm2787, %v2784, -inf
    %2789 = vmax.xlane.f32.xlu0 %v2788
    %v2790 = vpop.xlane.xlu0 %2789
    %v2791 = vsub.f32 %v2784, %v2790
    %v2792 = vmul.f32 %v2791, 1.442695
    %v2793 = vpow.pop %v2792
    %v2794 = vsel %vm2787, %v2793, 0.0
    %2795 = vadd.xlane.f32.xlu0 %v2794
    %v2796 = vpop.xlane.xlu0 %2795
    %v2797 = vlog2.pop %v2796
    %v2798 = vmul.f32 %v2797, 0.6931472
    %v2799 = vsub.f32 %v2791, %v2798
    %2800 = vst.msk [vmem:[#allocation2] sm:$0xff] %vm2787, %v2799
    // Predicated region
    $region22: #{tpu_custom_call.1} parent=1 // pred_check
      _
    $region23: #{tpu_custom_call.1} parent=1 // pred_check_branch
      %2802 = sbr.rel (0) target = $region25
    $region24: #{tpu_custom_call.1} parent=1 // pred_region
      %s2804 = ssub.s32 128, 128
      %2805 = vsyncadd [#allocation3], %s2804
      %s2807 = sshll.u32 [#allocation2], 4
      %s2808 = int_to_ptr.vmem [resolvable:$true] %s2807
      %2810 = dma.vmem_to_hbm [thread:$0]  %s2808, 128, %s5, [#allocation3]
    $region25: #{tpu_custom_call.1} parent=1 // pred_fallthru
      _
    // Predicated region
    $region26: #{tpu_custom_call.1} parent=1 // pred_check
      _
    $region27: #{tpu_custom_call.1} parent=1 // pred_check_branch
      %2812 = sbr.rel (0) target = $region29
    $region28: #{tpu_custom_call.1} parent=1 // pred_region
      %2813 = dma.done [#allocation3], 128
    $region29: #{tpu_custom_call.1} parent=1 // pred_fallthru
      _
    %2814 = vsyncpa [#allocation3], 1

</llo_original>
